<compile_context>
chip_gen: v7x
topology: tpu7x:2x2x1
jax: 0.10.0
libtpu: 0.0.40
codegen_flags: <defaults>
</compile_context>

<pallas_src>
import numpy as np
import jax
import jax.numpy as jnp
from jax.experimental import pallas as pl
from jax.experimental.pallas import tpu as pltpu

K = 3        # conv kernel size
EPS = 1e-5   # BatchNorm2d default eps
LANES = 128  # lane-dense output width

_VMEM = pl.BlockSpec(memory_space=pltpu.MemorySpace.VMEM)


# ------------------------------ fused Pallas kernel ------------------------------

def _make_kernel(n, h, k, c, ho1, wo1, ho2, wo2, wp, xpad, ypad):
    """Closure over static dims. Feature-map layout: (rows=(n,h), cols=(w,c))."""
    R = n * h
    f32 = jnp.float32
    inv_cnt1 = 1.0 / float(n * ho1 * wo1)
    inv_cnt2 = 1.0 / float(n * ho2 * wo2)
    groups2 = xpad // c  # channel groups in the (lane-padded) conv2 epilogue

    def fold(colvec, wo):
        # (1, >=wo*c) -> (1, c): per-channel sum via static lane slices + VPU
        # adds.  Keeps the BatchNorm fold off the MXU (no tiny f32 matmuls).
        s = colvec[:, 0:c]
        for v in range(1, wo):
            s = s + colvec[:, v * c:(v + 1) * c]
        return s

    def bn_relu(acc, maskf, g_ref, be_ref, wo, inv_cnt, out_groups):
        # Training-mode BatchNorm (two-pass, f32) + ReLU.  `maskf` zeroes the
        # rows that straddle image boundaries; columns beyond wo*c (lane
        # padding) are never folded into the statistics.
        mean = fold(jnp.sum(acc * maskf, axis=0, keepdims=True), wo) * inv_cnt
        mean_c = jnp.concatenate([mean] * out_groups, axis=1)
        cen = (acc - mean_c) * maskf
        var = fold(jnp.sum(cen * cen, axis=0, keepdims=True), wo) * inv_cnt
        inv = jax.lax.rsqrt(var + EPS)
        scale = g_ref[...] * inv                       # (1, c)
        shift = be_ref[...] - mean * scale             # (1, c)
        scale_c = jnp.concatenate([scale] * out_groups, axis=1)
        shift_c = jnp.concatenate([shift] * out_groups, axis=1)
        return jnp.maximum(acc * scale_c + shift_c, 0.0)

    def shifted_cat(a):
        # Fold the kh loop into the GEMM contraction: lane-concatenate the K
        # row-shifted copies of the slab.  Each shift is materialized exactly
        # once, via the XLU roll (off the vld/VPU/MXU critical path).
        parts = [a] + [pltpu.roll(a, R - s, axis=0) for s in range(1, k)]
        return jnp.concatenate(parts, axis=1)

    def kernel(x_ref, w1_ref, w2_ref, g1_ref, be1_ref, g2_ref, be2_ref,
               m1_ref, m2_ref, x_out_ref, y_out_ref):
        # ---- conv1: ONE bf16 GEMM over the whole (N*H) row slab ----
        lhs1 = shifted_cat(x_ref[...]).astype(jnp.bfloat16)             # (R, k*W*Cin)
        acc1 = jnp.dot(lhs1, w1_ref[...], preferred_element_type=f32)   # (R, wo1*c)
        h1 = bn_relu(acc1, m1_ref[...], g1_ref, be1_ref, wo1, inv_cnt1, wo1)

        # ---- conv2: ONE bf16 GEMM; RHS zero-padded to xpad output lanes ----
        lhs2 = shifted_cat(h1).astype(jnp.bfloat16)                      # (R, k*wo1*c)
        acc2 = jnp.dot(lhs2, w2_ref[...], preferred_element_type=f32)    # (R, xpad)
        h2 = bn_relu(acc2, m2_ref[...], g2_ref, be2_ref, wo2, inv_cnt2, groups2)
        x_out_ref[...] = h2                                              # dense aligned store

        # ---- AvgPool2d(2,2): row pairs via XLU roll + VPU add, col pairs via
        #      static lane slices; lane-padded to a dense (R, ypad) store. ----
        rs = h2 + pltpu.roll(h2, R - 1, axis=0)          # row r: h2[r] + h2[r+1]
        cols = [0.25 * (rs[:, (2 * q) * c:(2 * q + 1) * c]
                        + rs[:, (2 * q + 1) * c:(2 * q + 2) * c])
                for q in range(wp)]
        cols.append(jnp.zeros((R, ypad - wp * c), f32))
        y_out_ref[...] = jnp.concatenate(cols, axis=1)

    return kernel


# ------------------------------ host-built constants ------------------------------

def _toeplitz_weight(w_oihw, w_in, wo):
    """PyTorch (Cout,Cin,K,K) -> ONE block-Toeplitz GEMM weight of shape
    (K*w_in*Cin, wo*Cout), kh-major rows matching the lane-concatenated LHS."""
    cout, cin, k, _ = w_oihw.shape
    t = np.zeros((k, wo, w_in), np.float32)          # t[kw, v, w] = 1 iff w == v + kw
    for kw in range(k):
        for v in range(wo):
            t[kw, v, v + kw] = 1.0
    b = jnp.einsum('oihk,kvw->hwivo', w_oihw, jnp.asarray(t),
                   precision=jax.lax.Precision.HIGHEST)
    return b.reshape(k * w_in * cin, wo * cout).astype(jnp.bfloat16)


# ------------------------------ wrapper ------------------------------

@jax.jit
def conv_down_forward(x_nchw, params):
    """Pallas implementation of ConvDown.forward. Returns (x, y) in NCHW."""
    w1, _b1, g1, be1, w2, _b2, g2, be2 = params   # conv biases cancel under training-mode BN
    n, c_in, h, w = x_nchw.shape
    c_out = w1.shape[0]
    k = w1.shape[2]
    ho1, wo1 = h - k + 1, w - k + 1               # conv1: VALID, stride 1
    ho2, wo2 = ho1 - k + 1, wo1 - k + 1           # conv2: VALID, stride 1
    hp, wp = ho2 // 2, wo2 // 2                   # AvgPool2d(2, 2)
    R = n * h
    assert LANES % c_out == 0 and wo2 * c_out <= LANES and wp * c_out <= LANES

    # (N,C,H,W) -> lane-dense 2-D slab (N*H, W*Cin); shifts/casts happen in-kernel.
    x2d = jnp.transpose(x_nchw, (0, 2, 3, 1)).reshape(R, w * c_in).astype(jnp.float32)

    w1m = _toeplitz_weight(w1, w, wo1)                          # (K*W*Cin,    Wo1*Cout)
    w2m = _toeplitz_weight(w2, wo1, wo2)                        # (K*Wo1*Cout, Wo2*Cout)
    w2m = jnp.pad(w2m, ((0, 0), (0, LANES - wo2 * c_out)))      # lane-dense output

    # Valid-row masks (rows straddling an image boundary are garbage).
    rows = np.arange(R) % h
    m1 = jnp.asarray((rows < ho1).astype(np.float32).reshape(R, 1))
    m2 = jnp.asarray((rows < ho2).astype(np.float32).reshape(R, 1))

    kernel = _make_kernel(n, h, k, c_out, ho1, wo1, ho2, wo2, wp, LANES, LANES)

    xf, yf = pl.pallas_call(
        kernel,
        out_shape=(jax.ShapeDtypeStruct((R, LANES), jnp.float32),
                   jax.ShapeDtypeStruct((R, LANES), jnp.float32)),
        in_specs=[_VMEM] * 9,
        out_specs=(_VMEM, _VMEM),
    )(x2d, w1m, w2m,
      g1.reshape(1, -1), be1.reshape(1, -1),
      g2.reshape(1, -1), be2.reshape(1, -1),
      m1, m2)

    x_out = xf.reshape(n, h, LANES)[:, :ho2, :wo2 * c_out]
    x_out = jnp.transpose(x_out.reshape(n, ho2, wo2, c_out), (0, 3, 1, 2))
    y_out = yf.reshape(n, h, LANES)[:, 0:2 * hp:2, :wp * c_out]   # pool row p lives at row 2p
    y_out = jnp.transpose(y_out.reshape(n, hp, wp, c_out), (0, 3, 1, 2))
    return x_out, y_out


# ------------------------------ pure-JAX reference ------------------------------

def reference_forward(x, params):
    w1, b1, g1, be1, w2, b2, g2, be2 = params

    def conv(x, w, b):
        y = jax.lax.conv_general_dilated(
            x, w, window_strides=(1, 1), padding="VALID",
            dimension_numbers=("NCHW", "OIHW", "NCHW"),
            precision=jax.lax.Precision.HIGHEST)
        return y + b.reshape(1, -1, 1, 1)

    def bn_relu(x, g, be):
        mean = jnp.mean(x, axis=(0, 2, 3), keepdims=True)
        var = jnp.mean((x - mean) ** 2, axis=(0, 2, 3), keepdims=True)
        xn = (x - mean) / jnp.sqrt(var + EPS)
        return jnp.maximum(xn * g.reshape(1, -1, 1, 1) + be.reshape(1, -1, 1, 1), 0.0)

    h = bn_relu(conv(x, w1, b1), g1, be1)
    h = bn_relu(conv(h, w2, b2), g2, be2)
    y = 0.25 * (h[:, :, 0::2, 0::2] + h[:, :, 0::2, 1::2]
                + h[:, :, 1::2, 0::2] + h[:, :, 1::2, 1::2])
    return h, y


# ------------------------------------ main -----------------------------------

if __name__ == "__main__":
    key = jax.random.PRNGKey(0)
    kx, kw1, kb1, kg1, kbe1, kw2, kb2, kg2, kbe2 = jax.random.split(key, 9)

    N, C_IN, C_OUT, H, W = 2, 4, 8, 16, 16
    x = jax.random.normal(kx, (N, C_IN, H, W), jnp.float32)

    # Deterministic synthetic parameters (shapes per the module __init__).
    params = (
        0.2 * jax.random.normal(kw1, (C_OUT, C_IN, K, K), jnp.float32),   # conv1.weight
        0.1 * jax.random.normal(kb1, (C_OUT,), jnp.float32),              # conv1.bias
        1.0 + 0.1 * jax.random.normal(kg1, (C_OUT,), jnp.float32),        # bn1.weight
        0.1 * jax.random.normal(kbe1, (C_OUT,), jnp.float32),             # bn1.bias
        0.2 * jax.random.normal(kw2, (C_OUT, C_OUT, K, K), jnp.float32),  # conv2.weight
        0.1 * jax.random.normal(kb2, (C_OUT,), jnp.float32),              # conv2.bias
        1.0 + 0.1 * jax.random.normal(kg2, (C_OUT,), jnp.float32),        # bn2.weight
        0.1 * jax.random.normal(kbe2, (C_OUT,), jnp.float32),             # bn2.bias
    )

    x_out, y_out = conv_down_forward(x, params)
    jax.block_until_ready((x_out, y_out))

    x_ref, y_ref = reference_forward(x, params)
    assert x_out.shape == (N, C_OUT, H - 4, W - 4)
    assert y_out.shape == (N, C_OUT, (H - 4) // 2, (W - 4) // 2)
    np.testing.assert_allclose(np.asarray(x_out), np.asarray(x_ref),
                               rtol=5e-2, atol=5e-2)
    np.testing.assert_allclose(np.asarray(y_out), np.asarray(y_ref),
                               rtol=5e-2, atol=5e-2)
    print("KERNEL_OK")
</pallas_src>

<mosaic_0001>
module attributes {stable_mosaic.version = 11 : i64} {
  func.func @kernel(%arg0: memref<32x64xf32, #tpu.memory_space<vmem>>, %arg1: memref<192x112xbf16, #tpu.memory_space<vmem>>, %arg2: memref<336x128xbf16, #tpu.memory_space<vmem>>, %arg3: memref<1x8xf32, #tpu.memory_space<vmem>>, %arg4: memref<1x8xf32, #tpu.memory_space<vmem>>, %arg5: memref<1x8xf32, #tpu.memory_space<vmem>>, %arg6: memref<1x8xf32, #tpu.memory_space<vmem>>, %arg7: memref<32x1xf32, #tpu.memory_space<vmem>>, %arg8: memref<32x1xf32, #tpu.memory_space<vmem>>, %arg9: memref<32x128xf32, #tpu.memory_space<vmem>>, %arg10: memref<32x128xf32, #tpu.memory_space<vmem>>) attributes {dimension_semantics = [], scalar_prefetch = 0 : i64, scratch_operands = 0 : i64, tpu.core_type = #tpu.core_type<tc>} {
    %c0 = arith.constant 0 : index
    %c0_0 = arith.constant 0 : index
    %0 = vector.load %arg0[%c0, %c0_0] : memref<32x64xf32, #tpu.memory_space<vmem>>, vector<32x64xf32>
    %c31_i32 = arith.constant 31 : i32
    %1 = tpu.dynamic_rotate %0 by %c31_i32 dim 0 : vector<32x64xf32>, i32 -> vector<32x64xf32>
    %c30_i32 = arith.constant 30 : i32
    %2 = tpu.dynamic_rotate %0 by %c30_i32 dim 0 : vector<32x64xf32>, i32 -> vector<32x64xf32>
    %3 = tpu.concatenate %0, %1, %2 in 1 : vector<32x64xf32>, vector<32x64xf32>, vector<32x64xf32> -> vector<32x192xf32>
    %4 = arith.truncf %3 : vector<32x192xf32> to vector<32x192xbf16>
    %c0_1 = arith.constant 0 : index
    %c0_2 = arith.constant 0 : index
    %5 = vector.load %arg1[%c0_1, %c0_2] : memref<192x112xbf16, #tpu.memory_space<vmem>>, vector<192x112xbf16>
    %cst = arith.constant dense<0.000000e+00> : vector<32x112xf32>
    %6 = tpu.matmul %4, %5, %cst {dimension_numbers = #tpu.dot_dimension_numbers<[1], [0], [0], [1], [0, 0, 1, 1], [], []>} : vector<32x192xbf16>, vector<192x112xbf16>, vector<32x112xf32> -> vector<32x112xf32>
    %c0_3 = arith.constant 0 : index
    %c0_4 = arith.constant 0 : index
    %7 = vector.load %arg7[%c0_3, %c0_4] : memref<32x1xf32, #tpu.memory_space<vmem>>, vector<32x1xf32>
    %8 = vector.broadcast %7 : vector<32x1xf32> to vector<32x112xf32>
    %9 = arith.mulf %6, %8 : vector<32x112xf32>
    %cst_5 = arith.constant dense<0.000000e+00> : vector<112xf32>
    %10 = vector.multi_reduction <add>, %9, %cst_5 [0] : vector<32x112xf32> to vector<112xf32>
    %11 = vector.shape_cast %10 : vector<112xf32> to vector<1x112xf32>
    %12 = vector.extract_strided_slice %11 {offsets = [0, 0], sizes = [1, 8], strides = [1, 1]} : vector<1x112xf32> to vector<1x8xf32>
    %13 = vector.extract_strided_slice %11 {offsets = [0, 8], sizes = [1, 8], strides = [1, 1]} : vector<1x112xf32> to vector<1x8xf32>
    %14 = arith.addf %12, %13 : vector<1x8xf32>
    %15 = vector.extract_strided_slice %11 {offsets = [0, 16], sizes = [1, 8], strides = [1, 1]} : vector<1x112xf32> to vector<1x8xf32>
    %16 = arith.addf %14, %15 : vector<1x8xf32>
    %17 = vector.extract_strided_slice %11 {offsets = [0, 24], sizes = [1, 8], strides = [1, 1]} : vector<1x112xf32> to vector<1x8xf32>
    %18 = arith.addf %16, %17 : vector<1x8xf32>
    %19 = vector.extract_strided_slice %11 {offsets = [0, 32], sizes = [1, 8], strides = [1, 1]} : vector<1x112xf32> to vector<1x8xf32>
    %20 = arith.addf %18, %19 : vector<1x8xf32>
    %21 = vector.extract_strided_slice %11 {offsets = [0, 40], sizes = [1, 8], strides = [1, 1]} : vector<1x112xf32> to vector<1x8xf32>
    %22 = arith.addf %20, %21 : vector<1x8xf32>
    %23 = vector.extract_strided_slice %11 {offsets = [0, 48], sizes = [1, 8], strides = [1, 1]} : vector<1x112xf32> to vector<1x8xf32>
    %24 = arith.addf %22, %23 : vector<1x8xf32>
    %25 = vector.extract_strided_slice %11 {offsets = [0, 56], sizes = [1, 8], strides = [1, 1]} : vector<1x112xf32> to vector<1x8xf32>
    %26 = arith.addf %24, %25 : vector<1x8xf32>
    %27 = vector.extract_strided_slice %11 {offsets = [0, 64], sizes = [1, 8], strides = [1, 1]} : vector<1x112xf32> to vector<1x8xf32>
    %28 = arith.addf %26, %27 : vector<1x8xf32>
    %29 = vector.extract_strided_slice %11 {offsets = [0, 72], sizes = [1, 8], strides = [1, 1]} : vector<1x112xf32> to vector<1x8xf32>
    %30 = arith.addf %28, %29 : vector<1x8xf32>
    %31 = vector.extract_strided_slice %11 {offsets = [0, 80], sizes = [1, 8], strides = [1, 1]} : vector<1x112xf32> to vector<1x8xf32>
    %32 = arith.addf %30, %31 : vector<1x8xf32>
    %33 = vector.extract_strided_slice %11 {offsets = [0, 88], sizes = [1, 8], strides = [1, 1]} : vector<1x112xf32> to vector<1x8xf32>
    %34 = arith.addf %32, %33 : vector<1x8xf32>
    %35 = vector.extract_strided_slice %11 {offsets = [0, 96], sizes = [1, 8], strides = [1, 1]} : vector<1x112xf32> to vector<1x8xf32>
    %36 = arith.addf %34, %35 : vector<1x8xf32>
    %37 = vector.extract_strided_slice %11 {offsets = [0, 104], sizes = [1, 8], strides = [1, 1]} : vector<1x112xf32> to vector<1x8xf32>
    %38 = arith.addf %36, %37 : vector<1x8xf32>
    %cst_6 = arith.constant 0.00255102036 : f32
    %39 = vector.broadcast %cst_6 : f32 to vector<1x8xf32>
    %40 = arith.mulf %38, %39 : vector<1x8xf32>
    %41 = tpu.concatenate %40, %40, %40, %40, %40, %40, %40, %40, %40, %40, %40, %40, %40, %40 in 1 : vector<1x8xf32>, vector<1x8xf32>, vector<1x8xf32>, vector<1x8xf32>, vector<1x8xf32>, vector<1x8xf32>, vector<1x8xf32>, vector<1x8xf32>, vector<1x8xf32>, vector<1x8xf32>, vector<1x8xf32>, vector<1x8xf32>, vector<1x8xf32>, vector<1x8xf32> -> vector<1x112xf32>
    %42 = vector.broadcast %41 : vector<1x112xf32> to vector<32x112xf32>
    %43 = arith.subf %6, %42 : vector<32x112xf32>
    %44 = vector.broadcast %7 : vector<32x1xf32> to vector<32x112xf32>
    %45 = arith.mulf %43, %44 : vector<32x112xf32>
    %46 = arith.mulf %45, %45 : vector<32x112xf32>
    %cst_7 = arith.constant dense<0.000000e+00> : vector<112xf32>
    %47 = vector.multi_reduction <add>, %46, %cst_7 [0] : vector<32x112xf32> to vector<112xf32>
    %48 = vector.shape_cast %47 : vector<112xf32> to vector<1x112xf32>
    %49 = vector.extract_strided_slice %48 {offsets = [0, 0], sizes = [1, 8], strides = [1, 1]} : vector<1x112xf32> to vector<1x8xf32>
    %50 = vector.extract_strided_slice %48 {offsets = [0, 8], sizes = [1, 8], strides = [1, 1]} : vector<1x112xf32> to vector<1x8xf32>
    %51 = arith.addf %49, %50 : vector<1x8xf32>
    %52 = vector.extract_strided_slice %48 {offsets = [0, 16], sizes = [1, 8], strides = [1, 1]} : vector<1x112xf32> to vector<1x8xf32>
    %53 = arith.addf %51, %52 : vector<1x8xf32>
    %54 = vector.extract_strided_slice %48 {offsets = [0, 24], sizes = [1, 8], strides = [1, 1]} : vector<1x112xf32> to vector<1x8xf32>
    %55 = arith.addf %53, %54 : vector<1x8xf32>
    %56 = vector.extract_strided_slice %48 {offsets = [0, 32], sizes = [1, 8], strides = [1, 1]} : vector<1x112xf32> to vector<1x8xf32>
    %57 = arith.addf %55, %56 : vector<1x8xf32>
    %58 = vector.extract_strided_slice %48 {offsets = [0, 40], sizes = [1, 8], strides = [1, 1]} : vector<1x112xf32> to vector<1x8xf32>
    %59 = arith.addf %57, %58 : vector<1x8xf32>
    %60 = vector.extract_strided_slice %48 {offsets = [0, 48], sizes = [1, 8], strides = [1, 1]} : vector<1x112xf32> to vector<1x8xf32>
    %61 = arith.addf %59, %60 : vector<1x8xf32>
    %62 = vector.extract_strided_slice %48 {offsets = [0, 56], sizes = [1, 8], strides = [1, 1]} : vector<1x112xf32> to vector<1x8xf32>
    %63 = arith.addf %61, %62 : vector<1x8xf32>
    %64 = vector.extract_strided_slice %48 {offsets = [0, 64], sizes = [1, 8], strides = [1, 1]} : vector<1x112xf32> to vector<1x8xf32>
    %65 = arith.addf %63, %64 : vector<1x8xf32>
    %66 = vector.extract_strided_slice %48 {offsets = [0, 72], sizes = [1, 8], strides = [1, 1]} : vector<1x112xf32> to vector<1x8xf32>
    %67 = arith.addf %65, %66 : vector<1x8xf32>
    %68 = vector.extract_strided_slice %48 {offsets = [0, 80], sizes = [1, 8], strides = [1, 1]} : vector<1x112xf32> to vector<1x8xf32>
    %69 = arith.addf %67, %68 : vector<1x8xf32>
    %70 = vector.extract_strided_slice %48 {offsets = [0, 88], sizes = [1, 8], strides = [1, 1]} : vector<1x112xf32> to vector<1x8xf32>
    %71 = arith.addf %69, %70 : vector<1x8xf32>
    %72 = vector.extract_strided_slice %48 {offsets = [0, 96], sizes = [1, 8], strides = [1, 1]} : vector<1x112xf32> to vector<1x8xf32>
    %73 = arith.addf %71, %72 : vector<1x8xf32>
    %74 = vector.extract_strided_slice %48 {offsets = [0, 104], sizes = [1, 8], strides = [1, 1]} : vector<1x112xf32> to vector<1x8xf32>
    %75 = arith.addf %73, %74 : vector<1x8xf32>
    %cst_8 = arith.constant 0.00255102036 : f32
    %76 = vector.broadcast %cst_8 : f32 to vector<1x8xf32>
    %77 = arith.mulf %75, %76 : vector<1x8xf32>
    %cst_9 = arith.constant 9.99999974E-6 : f32
    %78 = vector.broadcast %cst_9 : f32 to vector<1x8xf32>
    %79 = arith.addf %77, %78 : vector<1x8xf32>
    %80 = math.rsqrt %79 : vector<1x8xf32>
    %c0_10 = arith.constant 0 : index
    %c0_11 = arith.constant 0 : index
    %81 = vector.load %arg3[%c0_10, %c0_11] : memref<1x8xf32, #tpu.memory_space<vmem>>, vector<1x8xf32>
    %82 = arith.mulf %81, %80 : vector<1x8xf32>
    %c0_12 = arith.constant 0 : index
    %c0_13 = arith.constant 0 : index
    %83 = vector.load %arg4[%c0_12, %c0_13] : memref<1x8xf32, #tpu.memory_space<vmem>>, vector<1x8xf32>
    %84 = arith.mulf %40, %82 : vector<1x8xf32>
    %85 = arith.subf %83, %84 : vector<1x8xf32>
    %86 = tpu.concatenate %82, %82, %82, %82, %82, %82, %82, %82, %82, %82, %82, %82, %82, %82 in 1 : vector<1x8xf32>, vector<1x8xf32>, vector<1x8xf32>, vector<1x8xf32>, vector<1x8xf32>, vector<1x8xf32>, vector<1x8xf32>, vector<1x8xf32>, vector<1x8xf32>, vector<1x8xf32>, vector<1x8xf32>, vector<1x8xf32>, vector<1x8xf32>, vector<1x8xf32> -> vector<1x112xf32>
    %87 = tpu.concatenate %85, %85, %85, %85, %85, %85, %85, %85, %85, %85, %85, %85, %85, %85 in 1 : vector<1x8xf32>, vector<1x8xf32>, vector<1x8xf32>, vector<1x8xf32>, vector<1x8xf32>, vector<1x8xf32>, vector<1x8xf32>, vector<1x8xf32>, vector<1x8xf32>, vector<1x8xf32>, vector<1x8xf32>, vector<1x8xf32>, vector<1x8xf32>, vector<1x8xf32> -> vector<1x112xf32>
    %88 = vector.broadcast %86 : vector<1x112xf32> to vector<32x112xf32>
    %89 = arith.mulf %6, %88 : vector<32x112xf32>
    %90 = vector.broadcast %87 : vector<1x112xf32> to vector<32x112xf32>
    %91 = arith.addf %89, %90 : vector<32x112xf32>
    %cst_14 = arith.constant 0.000000e+00 : f32
    %92 = vector.broadcast %cst_14 : f32 to vector<32x112xf32>
    %93 = arith.maximumf %91, %92 : vector<32x112xf32>
    %c31_i32_15 = arith.constant 31 : i32
    %94 = tpu.dynamic_rotate %93 by %c31_i32_15 dim 0 : vector<32x112xf32>, i32 -> vector<32x112xf32>
    %c30_i32_16 = arith.constant 30 : i32
    %95 = tpu.dynamic_rotate %93 by %c30_i32_16 dim 0 : vector<32x112xf32>, i32 -> vector<32x112xf32>
    %96 = tpu.concatenate %93, %94, %95 in 1 : vector<32x112xf32>, vector<32x112xf32>, vector<32x112xf32> -> vector<32x336xf32>
    %97 = arith.truncf %96 : vector<32x336xf32> to vector<32x336xbf16>
    %c0_17 = arith.constant 0 : index
    %c0_18 = arith.constant 0 : index
    %98 = vector.load %arg2[%c0_17, %c0_18] : memref<336x128xbf16, #tpu.memory_space<vmem>>, vector<336x128xbf16>
    %cst_19 = arith.constant dense<0.000000e+00> : vector<32x128xf32>
    %99 = tpu.matmul %97, %98, %cst_19 {dimension_numbers = #tpu.dot_dimension_numbers<[1], [0], [0], [1], [0, 0, 1, 1], [], []>} : vector<32x336xbf16>, vector<336x128xbf16>, vector<32x128xf32> -> vector<32x128xf32>
    %c0_20 = arith.constant 0 : index
    %c0_21 = arith.constant 0 : index
    %100 = vector.load %arg8[%c0_20, %c0_21] : memref<32x1xf32, #tpu.memory_space<vmem>>, vector<32x1xf32>
    %101 = vector.broadcast %100 : vector<32x1xf32> to vector<32x128xf32>
    %102 = arith.mulf %99, %101 : vector<32x128xf32>
    %cst_22 = arith.constant dense<0.000000e+00> : vector<128xf32>
    %103 = vector.multi_reduction <add>, %102, %cst_22 [0] : vector<32x128xf32> to vector<128xf32>
    %104 = vector.shape_cast %103 : vector<128xf32> to vector<1x128xf32>
    %105 = vector.extract_strided_slice %104 {offsets = [0, 0], sizes = [1, 8], strides = [1, 1]} : vector<1x128xf32> to vector<1x8xf32>
    %106 = vector.extract_strided_slice %104 {offsets = [0, 8], sizes = [1, 8], strides = [1, 1]} : vector<1x128xf32> to vector<1x8xf32>
    %107 = arith.addf %105, %106 : vector<1x8xf32>
    %108 = vector.extract_strided_slice %104 {offsets = [0, 16], sizes = [1, 8], strides = [1, 1]} : vector<1x128xf32> to vector<1x8xf32>
    %109 = arith.addf %107, %108 : vector<1x8xf32>
    %110 = vector.extract_strided_slice %104 {offsets = [0, 24], sizes = [1, 8], strides = [1, 1]} : vector<1x128xf32> to vector<1x8xf32>
    %111 = arith.addf %109, %110 : vector<1x8xf32>
    %112 = vector.extract_strided_slice %104 {offsets = [0, 32], sizes = [1, 8], strides = [1, 1]} : vector<1x128xf32> to vector<1x8xf32>
    %113 = arith.addf %111, %112 : vector<1x8xf32>
    %114 = vector.extract_strided_slice %104 {offsets = [0, 40], sizes = [1, 8], strides = [1, 1]} : vector<1x128xf32> to vector<1x8xf32>
    %115 = arith.addf %113, %114 : vector<1x8xf32>
    %116 = vector.extract_strided_slice %104 {offsets = [0, 48], sizes = [1, 8], strides = [1, 1]} : vector<1x128xf32> to vector<1x8xf32>
    %117 = arith.addf %115, %116 : vector<1x8xf32>
    %118 = vector.extract_strided_slice %104 {offsets = [0, 56], sizes = [1, 8], strides = [1, 1]} : vector<1x128xf32> to vector<1x8xf32>
    %119 = arith.addf %117, %118 : vector<1x8xf32>
    %120 = vector.extract_strided_slice %104 {offsets = [0, 64], sizes = [1, 8], strides = [1, 1]} : vector<1x128xf32> to vector<1x8xf32>
    %121 = arith.addf %119, %120 : vector<1x8xf32>
    %122 = vector.extract_strided_slice %104 {offsets = [0, 72], sizes = [1, 8], strides = [1, 1]} : vector<1x128xf32> to vector<1x8xf32>
    %123 = arith.addf %121, %122 : vector<1x8xf32>
    %124 = vector.extract_strided_slice %104 {offsets = [0, 80], sizes = [1, 8], strides = [1, 1]} : vector<1x128xf32> to vector<1x8xf32>
    %125 = arith.addf %123, %124 : vector<1x8xf32>
    %126 = vector.extract_strided_slice %104 {offsets = [0, 88], sizes = [1, 8], strides = [1, 1]} : vector<1x128xf32> to vector<1x8xf32>
    %127 = arith.addf %125, %126 : vector<1x8xf32>
    %cst_23 = arith.constant 0.00347222225 : f32
    %128 = vector.broadcast %cst_23 : f32 to vector<1x8xf32>
    %129 = arith.mulf %127, %128 : vector<1x8xf32>
    %130 = tpu.concatenate %129, %129, %129, %129, %129, %129, %129, %129, %129, %129, %129, %129, %129, %129, %129, %129 in 1 : vector<1x8xf32>, vector<1x8xf32>, vector<1x8xf32>, vector<1x8xf32>, vector<1x8xf32>, vector<1x8xf32>, vector<1x8xf32>, vector<1x8xf32>, vector<1x8xf32>, vector<1x8xf32>, vector<1x8xf32>, vector<1x8xf32>, vector<1x8xf32>, vector<1x8xf32>, vector<1x8xf32>, vector<1x8xf32> -> vector<1x128xf32>
    %131 = vector.broadcast %130 : vector<1x128xf32> to vector<32x128xf32>
    %132 = arith.subf %99, %131 : vector<32x128xf32>
    %133 = vector.broadcast %100 : vector<32x1xf32> to vector<32x128xf32>
    %134 = arith.mulf %132, %133 : vector<32x128xf32>
    %135 = arith.mulf %134, %134 : vector<32x128xf32>
    %cst_24 = arith.constant dense<0.000000e+00> : vector<128xf32>
    %136 = vector.multi_reduction <add>, %135, %cst_24 [0] : vector<32x128xf32> to vector<128xf32>
    %137 = vector.shape_cast %136 : vector<128xf32> to vector<1x128xf32>
    %138 = vector.extract_strided_slice %137 {offsets = [0, 0], sizes = [1, 8], strides = [1, 1]} : vector<1x128xf32> to vector<1x8xf32>
    %139 = vector.extract_strided_slice %137 {offsets = [0, 8], sizes = [1, 8], strides = [1, 1]} : vector<1x128xf32> to vector<1x8xf32>
    %140 = arith.addf %138, %139 : vector<1x8xf32>
    %141 = vector.extract_strided_slice %137 {offsets = [0, 16], sizes = [1, 8], strides = [1, 1]} : vector<1x128xf32> to vector<1x8xf32>
    %142 = arith.addf %140, %141 : vector<1x8xf32>
    %143 = vector.extract_strided_slice %137 {offsets = [0, 24], sizes = [1, 8], strides = [1, 1]} : vector<1x128xf32> to vector<1x8xf32>
    %144 = arith.addf %142, %143 : vector<1x8xf32>
    %145 = vector.extract_strided_slice %137 {offsets = [0, 32], sizes = [1, 8], strides = [1, 1]} : vector<1x128xf32> to vector<1x8xf32>
    %146 = arith.addf %144, %145 : vector<1x8xf32>
    %147 = vector.extract_strided_slice %137 {offsets = [0, 40], sizes = [1, 8], strides = [1, 1]} : vector<1x128xf32> to vector<1x8xf32>
    %148 = arith.addf %146, %147 : vector<1x8xf32>
    %149 = vector.extract_strided_slice %137 {offsets = [0, 48], sizes = [1, 8], strides = [1, 1]} : vector<1x128xf32> to vector<1x8xf32>
    %150 = arith.addf %148, %149 : vector<1x8xf32>
    %151 = vector.extract_strided_slice %137 {offsets = [0, 56], sizes = [1, 8], strides = [1, 1]} : vector<1x128xf32> to vector<1x8xf32>
    %152 = arith.addf %150, %151 : vector<1x8xf32>
    %153 = vector.extract_strided_slice %137 {offsets = [0, 64], sizes = [1, 8], strides = [1, 1]} : vector<1x128xf32> to vector<1x8xf32>
    %154 = arith.addf %152, %153 : vector<1x8xf32>
    %155 = vector.extract_strided_slice %137 {offsets = [0, 72], sizes = [1, 8], strides = [1, 1]} : vector<1x128xf32> to vector<1x8xf32>
    %156 = arith.addf %154, %155 : vector<1x8xf32>
    %157 = vector.extract_strided_slice %137 {offsets = [0, 80], sizes = [1, 8], strides = [1, 1]} : vector<1x128xf32> to vector<1x8xf32>
    %158 = arith.addf %156, %157 : vector<1x8xf32>
    %159 = vector.extract_strided_slice %137 {offsets = [0, 88], sizes = [1, 8], strides = [1, 1]} : vector<1x128xf32> to vector<1x8xf32>
    %160 = arith.addf %158, %159 : vector<1x8xf32>
    %cst_25 = arith.constant 0.00347222225 : f32
    %161 = vector.broadcast %cst_25 : f32 to vector<1x8xf32>
    %162 = arith.mulf %160, %161 : vector<1x8xf32>
    %cst_26 = arith.constant 9.99999974E-6 : f32
    %163 = vector.broadcast %cst_26 : f32 to vector<1x8xf32>
    %164 = arith.addf %162, %163 : vector<1x8xf32>
    %165 = math.rsqrt %164 : vector<1x8xf32>
    %c0_27 = arith.constant 0 : index
    %c0_28 = arith.constant 0 : index
    %166 = vector.load %arg5[%c0_27, %c0_28] : memref<1x8xf32, #tpu.memory_space<vmem>>, vector<1x8xf32>
    %167 = arith.mulf %166, %165 : vector<1x8xf32>
    %c0_29 = arith.constant 0 : index
    %c0_30 = arith.constant 0 : index
    %168 = vector.load %arg6[%c0_29, %c0_30] : memref<1x8xf32, #tpu.memory_space<vmem>>, vector<1x8xf32>
    %169 = arith.mulf %129, %167 : vector<1x8xf32>
    %170 = arith.subf %168, %169 : vector<1x8xf32>
    %171 = tpu.concatenate %167, %167, %167, %167, %167, %167, %167, %167, %167, %167, %167, %167, %167, %167, %167, %167 in 1 : vector<1x8xf32>, vector<1x8xf32>, vector<1x8xf32>, vector<1x8xf32>, vector<1x8xf32>, vector<1x8xf32>, vector<1x8xf32>, vector<1x8xf32>, vector<1x8xf32>, vector<1x8xf32>, vector<1x8xf32>, vector<1x8xf32>, vector<1x8xf32>, vector<1x8xf32>, vector<1x8xf32>, vector<1x8xf32> -> vector<1x128xf32>
    %172 = tpu.concatenate %170, %170, %170, %170, %170, %170, %170, %170, %170, %170, %170, %170, %170, %170, %170, %170 in 1 : vector<1x8xf32>, vector<1x8xf32>, vector<1x8xf32>, vector<1x8xf32>, vector<1x8xf32>, vector<1x8xf32>, vector<1x8xf32>, vector<1x8xf32>, vector<1x8xf32>, vector<1x8xf32>, vector<1x8xf32>, vector<1x8xf32>, vector<1x8xf32>, vector<1x8xf32>, vector<1x8xf32>, vector<1x8xf32> -> vector<1x128xf32>
    %173 = vector.broadcast %171 : vector<1x128xf32> to vector<32x128xf32>
    %174 = arith.mulf %99, %173 : vector<32x128xf32>
    %175 = vector.broadcast %172 : vector<1x128xf32> to vector<32x128xf32>
    %176 = arith.addf %174, %175 : vector<32x128xf32>
    %cst_31 = arith.constant 0.000000e+00 : f32
    %177 = vector.broadcast %cst_31 : f32 to vector<32x128xf32>
    %178 = arith.maximumf %176, %177 : vector<32x128xf32>
    %c0_32 = arith.constant 0 : index
    %c0_33 = arith.constant 0 : index
    %179 = vector.load %arg9[%c0_32, %c0_33] : memref<32x128xf32, #tpu.memory_space<vmem>>, vector<32x128xf32>
    tpu.vector_store %arg9[%c0_32, %c0_33], %178 {strides = array<i32>} : memref<32x128xf32, #tpu.memory_space<vmem>>, vector<32x128xf32>,
    %c31_i32_34 = arith.constant 31 : i32
    %180 = tpu.dynamic_rotate %178 by %c31_i32_34 dim 0 : vector<32x128xf32>, i32 -> vector<32x128xf32>
    %181 = arith.addf %178, %180 : vector<32x128xf32>
    %182 = vector.extract_strided_slice %181 {offsets = [0, 0], sizes = [32, 8], strides = [1, 1]} : vector<32x128xf32> to vector<32x8xf32>
    %183 = vector.extract_strided_slice %181 {offsets = [0, 8], sizes = [32, 8], strides = [1, 1]} : vector<32x128xf32> to vector<32x8xf32>
    %184 = arith.addf %182, %183 : vector<32x8xf32>
    %cst_35 = arith.constant 2.500000e-01 : f32
    %185 = vector.broadcast %cst_35 : f32 to vector<32x8xf32>
    %186 = arith.mulf %185, %184 : vector<32x8xf32>
    %187 = vector.extract_strided_slice %181 {offsets = [0, 16], sizes = [32, 8], strides = [1, 1]} : vector<32x128xf32> to vector<32x8xf32>
    %188 = vector.extract_strided_slice %181 {offsets = [0, 24], sizes = [32, 8], strides = [1, 1]} : vector<32x128xf32> to vector<32x8xf32>
    %189 = arith.addf %187, %188 : vector<32x8xf32>
    %cst_36 = arith.constant 2.500000e-01 : f32
    %190 = vector.broadcast %cst_36 : f32 to vector<32x8xf32>
    %191 = arith.mulf %190, %189 : vector<32x8xf32>
    %192 = vector.extract_strided_slice %181 {offsets = [0, 32], sizes = [32, 8], strides = [1, 1]} : vector<32x128xf32> to vector<32x8xf32>
    %193 = vector.extract_strided_slice %181 {offsets = [0, 40], sizes = [32, 8], strides = [1, 1]} : vector<32x128xf32> to vector<32x8xf32>
    %194 = arith.addf %192, %193 : vector<32x8xf32>
    %cst_37 = arith.constant 2.500000e-01 : f32
    %195 = vector.broadcast %cst_37 : f32 to vector<32x8xf32>
    %196 = arith.mulf %195, %194 : vector<32x8xf32>
    %197 = vector.extract_strided_slice %181 {offsets = [0, 48], sizes = [32, 8], strides = [1, 1]} : vector<32x128xf32> to vector<32x8xf32>
    %198 = vector.extract_strided_slice %181 {offsets = [0, 56], sizes = [32, 8], strides = [1, 1]} : vector<32x128xf32> to vector<32x8xf32>
    %199 = arith.addf %197, %198 : vector<32x8xf32>
    %cst_38 = arith.constant 2.500000e-01 : f32
    %200 = vector.broadcast %cst_38 : f32 to vector<32x8xf32>
    %201 = arith.mulf %200, %199 : vector<32x8xf32>
    %202 = vector.extract_strided_slice %181 {offsets = [0, 64], sizes = [32, 8], strides = [1, 1]} : vector<32x128xf32> to vector<32x8xf32>
    %203 = vector.extract_strided_slice %181 {offsets = [0, 72], sizes = [32, 8], strides = [1, 1]} : vector<32x128xf32> to vector<32x8xf32>
    %204 = arith.addf %202, %203 : vector<32x8xf32>
    %cst_39 = arith.constant 2.500000e-01 : f32
    %205 = vector.broadcast %cst_39 : f32 to vector<32x8xf32>
    %206 = arith.mulf %205, %204 : vector<32x8xf32>
    %207 = vector.extract_strided_slice %181 {offsets = [0, 80], sizes = [32, 8], strides = [1, 1]} : vector<32x128xf32> to vector<32x8xf32>
    %208 = vector.extract_strided_slice %181 {offsets = [0, 88], sizes = [32, 8], strides = [1, 1]} : vector<32x128xf32> to vector<32x8xf32>
    %209 = arith.addf %207, %208 : vector<32x8xf32>
    %cst_40 = arith.constant 2.500000e-01 : f32
    %210 = vector.broadcast %cst_40 : f32 to vector<32x8xf32>
    %211 = arith.mulf %210, %209 : vector<32x8xf32>
    %cst_41 = arith.constant 0.000000e+00 : f32
    %212 = vector.broadcast %cst_41 : f32 to vector<32x80xf32>
    %213 = tpu.concatenate %186, %191, %196, %201, %206, %211, %212 in 1 : vector<32x8xf32>, vector<32x8xf32>, vector<32x8xf32>, vector<32x8xf32>, vector<32x8xf32>, vector<32x8xf32>, vector<32x80xf32> -> vector<32x128xf32>
    %c0_42 = arith.constant 0 : index
    %c0_43 = arith.constant 0 : index
    %214 = vector.load %arg10[%c0_42, %c0_43] : memref<32x128xf32, #tpu.memory_space<vmem>>, vector<32x128xf32>
    tpu.vector_store %arg10[%c0_42, %c0_43], %213 {strides = array<i32>} : memref<32x128xf32, #tpu.memory_space<vmem>>, vector<32x128xf32>,
    return
  }
}

</mosaic_0001>

<llo_original>
// kernel: conv_down_forward.1
$region0: #{conv_down_forward.1}
  #allocation0 [shape = 'u32[]', space=smem, size = 0x4, offset = 0x4, fixed_abs, tag = 'smem constant byte address 0x4 - core index']
  #allocation1 [shape = 'u32[144,128]{1,0:T(1,128)}', space=vmem, size = 0x12000, scoped, tag = 'internal scratch']
  %s0 = inlined_call_operand.vmem [shape: f32[32,64], index: 0, kind: input, shape index: {}]
  %s1 = inlined_call_operand.vmem [shape: bf16[192,112], index: 1, kind: input, shape index: {}]
  %s2 = inlined_call_operand.vmem [shape: bf16[336,128], index: 2, kind: input, shape index: {}]
  %s3 = inlined_call_operand.vmem [shape: f32[1,8], index: 3, kind: input, shape index: {}]
  %s4 = inlined_call_operand.vmem [shape: f32[1,8], index: 4, kind: input, shape index: {}]
  %s5 = inlined_call_operand.vmem [shape: f32[1,8], index: 5, kind: input, shape index: {}]
  %s6 = inlined_call_operand.vmem [shape: f32[1,8], index: 6, kind: input, shape index: {}]
  %s7 = inlined_call_operand.vmem [shape: f32[32,1], index: 7, kind: input, shape index: {}]
  %s8 = inlined_call_operand.vmem [shape: f32[32,1], index: 8, kind: input, shape index: {}]
  %s9 = inlined_call_operand.vmem [shape: f32[32,128], index: 9, kind: output, shape index: {0}]
  %s10 = inlined_call_operand.vmem [shape: f32[32,128], index: 10, kind: output, shape index: {1}]
  %11 = xla_tuple %s9, %s10
  %s12 = sld [smem:[#allocation0]]
  $region54: #{conv_down_forward.1} parent=0
    _
  %s14 = ssub.s32 1, %s12
  %s15 = scalar_select 0, %s14, %s12
  // Predicated region
  $region2: #{conv_down_forward.1} parent=0 // pred_check
    _
  $region3: #{conv_down_forward.1} parent=0 // pred_check_branch
    %17 = sbr.rel (0) target = $region5
  $region4: #{conv_down_forward.1} parent=0 // pred_region
    _
  $region5: #{conv_down_forward.1} parent=0 // pred_fallthru
    _
  // Predicated region
  $region6: #{conv_down_forward.1} parent=0 // pred_check
    _
  $region7: #{conv_down_forward.1} parent=0 // pred_check_branch
    %19 = sbr.rel (0) target = $region9
  $region8: #{conv_down_forward.1} parent=0 // pred_region
    _
  $region9: #{conv_down_forward.1} parent=0 // pred_fallthru
    _
  // Predicated region
  $region10: #{conv_down_forward.1} parent=0 // pred_check
    _
  $region11: #{conv_down_forward.1} parent=0 // pred_check_branch
    %21 = sbr.rel (0) target = $region13
  $region12: #{conv_down_forward.1} parent=0 // pred_region
    _
  $region13: #{conv_down_forward.1} parent=0 // pred_fallthru
    _
  // Predicated region
  $region14: #{conv_down_forward.1} parent=0 // pred_check
    _
  $region15: #{conv_down_forward.1} parent=0 // pred_check_branch
    %23 = sbr.rel (0) target = $region17
  $region16: #{conv_down_forward.1} parent=0 // pred_region
    _
  $region17: #{conv_down_forward.1} parent=0 // pred_fallthru
    _
  // Predicated region
  $region18: #{conv_down_forward.1} parent=0 // pred_check
    _
  $region19: #{conv_down_forward.1} parent=0 // pred_check_branch
    %25 = sbr.rel (0) target = $region21
  $region20: #{conv_down_forward.1} parent=0 // pred_region
    _
  $region21: #{conv_down_forward.1} parent=0 // pred_fallthru
    _
  // Predicated region
  $region22: #{conv_down_forward.1} parent=0 // pred_check
    _
  $region23: #{conv_down_forward.1} parent=0 // pred_check_branch
    %27 = sbr.rel (0) target = $region25
  $region24: #{conv_down_forward.1} parent=0 // pred_region
    _
  $region25: #{conv_down_forward.1} parent=0 // pred_fallthru
    _
  // Predicated region
  $region26: #{conv_down_forward.1} parent=0 // pred_check
    _
  $region27: #{conv_down_forward.1} parent=0 // pred_check_branch
    %29 = sbr.rel (0) target = $region29
  $region28: #{conv_down_forward.1} parent=0 // pred_region
    _
  $region29: #{conv_down_forward.1} parent=0 // pred_fallthru
    _
  // Predicated region
  $region30: #{conv_down_forward.1} parent=0 // pred_check
    _
  $region31: #{conv_down_forward.1} parent=0 // pred_check_branch
    %31 = sbr.rel (0) target = $region33
  $region32: #{conv_down_forward.1} parent=0 // pred_region
    _
  $region33: #{conv_down_forward.1} parent=0 // pred_fallthru
    _
  // Predicated region
  $region34: #{conv_down_forward.1} parent=0 // pred_check
    _
  $region35: #{conv_down_forward.1} parent=0 // pred_check_branch
    %33 = sbr.rel (0) target = $region37
  $region36: #{conv_down_forward.1} parent=0 // pred_region
    _
  $region37: #{conv_down_forward.1} parent=0 // pred_fallthru
    _
  %v35 = vld [vmem:[%s0] sm:$0xff]
  %v36 = vld [vmem:[%s0 + $0x8] sm:$0xff]
  %v37 = vld [vmem:[%s0 + $0x10] sm:$0xff]
  %v38 = vld [vmem:[%s0 + $0x18] sm:$0xff]
  %v39 = vrot.slane %v35, 1
  %v40 = vrot.slane %v36, 1
  %v41 = vrot.slane %v37, 1
  %v42 = vrot.slane %v38, 1
  %v43 = vlaneseq
  %v44 = vshrl.u32 %v43, 7
  %vm45 = vcmp.lt.s32.totalorder %v44, 7
  %v46 = vsel %vm45, %v41, %v42
  %v47 = vsel %vm45, %v40, %v41
  %v48 = vsel %vm45, %v39, %v40
  %v49 = vsel %vm45, %v42, %v39
  %v50 = vrot.slane %v35, 2
  %v51 = vrot.slane %v36, 2
  %v52 = vrot.slane %v37, 2
  %v53 = vrot.slane %v38, 2
  %vm54 = vcmp.lt.s32.totalorder %v44, 6
  %v55 = vsel %vm54, %v52, %v53
  %v56 = vsel %vm54, %v51, %v52
  %v57 = vsel %vm54, %v50, %v51
  %v58 = vsel %vm54, %v53, %v50
  %63 = vrot.lane.b32.xlu0 %v48, 64
  %v64 = vpop.permute.xlu0 %63
  %65 = vrot.lane.b32.xlu0 %v47, 64
  %v66 = vpop.permute.xlu0 %65
  %67 = vrot.lane.b32.xlu0 %v46, 64
  %v68 = vpop.permute.xlu0 %67
  %69 = vrot.lane.b32.xlu0 %v49, 64
  %v70 = vpop.permute.xlu0 %69
  %vm75 = vcmask 523264
  %v76 = vsel %vm75, %v35, %v64
  %v77 = vsel %vm75, %v36, %v66
  %v78 = vsel %vm75, %v37, %v68
  %v79 = vsel %vm75, %v38, %v70
  %v80 = vpack.c.bf16 %v77, %v76
  %v81 = vpack.c.bf16 %v56, %v57
  %v82 = vpack.c.bf16 %v79, %v78
  %v83 = vpack.c.bf16 %v58, %v55
  %v84 = vld [vmem:[%s1] sm:$0xf]
  %v85 = vld [vmem:[%s1 + $0x4] sm:$0xf]
  %v86 = vld [vmem:[%s1 + $0x8] sm:$0xf]
  %v87 = vld [vmem:[%s1 + $0xc] sm:$0xf]
  %v88 = vld [vmem:[%s1 + $0x10] sm:$0xf]
  %v89 = vld [vmem:[%s1 + $0x14] sm:$0xf]
  %v90 = vld [vmem:[%s1 + $0x18] sm:$0xf]
  %v91 = vld [vmem:[%s1 + $0x1c] sm:$0xf]
  %v92 = vld [vmem:[%s1 + $0x20] sm:$0xf]
  %v93 = vld [vmem:[%s1 + $0x24] sm:$0xf]
  %v94 = vld [vmem:[%s1 + $0x28] sm:$0xf]
  %v95 = vld [vmem:[%s1 + $0x2c] sm:$0xf]
  %v96 = vld [vmem:[%s1 + $0x30] sm:$0xf]
  %v97 = vld [vmem:[%s1 + $0x34] sm:$0xf]
  %v98 = vld [vmem:[%s1 + $0x38] sm:$0xf]
  %v99 = vld [vmem:[%s1 + $0x3c] sm:$0xf]
  %v100 = vld [vmem:[%s1 + $0x40] sm:$0xf]
  %v101 = vld [vmem:[%s1 + $0x44] sm:$0xf]
  %v102 = vld [vmem:[%s1 + $0x48] sm:$0xf]
  %v103 = vld [vmem:[%s1 + $0x4c] sm:$0xf]
  %v104 = vld [vmem:[%s1 + $0x50] sm:$0xf]
  %v105 = vld [vmem:[%s1 + $0x54] sm:$0xf]
  %v106 = vld [vmem:[%s1 + $0x58] sm:$0xf]
  %v107 = vld [vmem:[%s1 + $0x5c] sm:$0xf]
  %v132 = vunpack.c.l.b16 %v84
  %v133 = vunpack.c.l.b16 %v85
  %v134 = vunpack.c.l.b16 %v86
  %v135 = vunpack.c.l.b16 %v87
  %v136 = vunpack.c.l.b16 %v88
  %v137 = vunpack.c.l.b16 %v89
  %v138 = vunpack.c.l.b16 %v90
  %v139 = vunpack.c.l.b16 %v91
  %v140 = vunpack.c.l.b16 %v92
  %v141 = vunpack.c.l.b16 %v93
  %v142 = vunpack.c.l.b16 %v94
  %v143 = vunpack.c.l.b16 %v95
  %v144 = vunpack.c.l.b16 %v96
  %v145 = vunpack.c.l.b16 %v97
  %v146 = vunpack.c.l.b16 %v98
  %v147 = vunpack.c.l.b16 %v99
  %v148 = vunpack.c.l.b16 %v100
  %v149 = vunpack.c.l.b16 %v101
  %v150 = vunpack.c.l.b16 %v102
  %v151 = vunpack.c.l.b16 %v103
  %v152 = vunpack.c.l.b16 %v104
  %v153 = vunpack.c.l.b16 %v105
  %v154 = vunpack.c.l.b16 %v106
  %v155 = vunpack.c.l.b16 %v107
  %v156 = vpack.c.b16 %v133, %v132
  %v157 = vpack.c.b16 %v135, %v134
  %v158 = vpack.c.b16 %v137, %v136
  %v159 = vpack.c.b16 %v139, %v138
  %v160 = vpack.c.b16 %v141, %v140
  %v161 = vpack.c.b16 %v143, %v142
  %v162 = vpack.c.b16 %v145, %v144
  %v163 = vpack.c.b16 %v147, %v146
  %v164 = vpack.c.b16 %v149, %v148
  %v165 = vpack.c.b16 %v151, %v150
  %v166 = vpack.c.b16 %v153, %v152
  %v167 = vpack.c.b16 %v155, %v154
  %v181 = vsel %vm75, %v81, 0
  %v184 = vsel %vm75, %v83, 0
  %186 = vmatprep.subr.bf16.mxu0 0
  %187 = vmatpush1.bf16.msra.mxu0 %v156
  %188 = vmatprep.subr.bf16.mxu0 0
  %189 = vmatpush1.bf16.msra.mxu0 %v157
  %190 = vmatprep.subr.bf16.mxu0 0
  %191 = vmatpush1.bf16.msra.mxu0 %v158
  %192 = vmatprep.subr.bf16.mxu0 0
  %193 = vmatpush1.bf16.msra.mxu0 %v159
  %194 = vmatprep.subr.bf16.mxu0 0
  %195 = vmatpush1.bf16.msra.mxu0 %v160
  %196 = vmatprep.subr.bf16.mxu0 0
  %197 = vmatpush1.bf16.msra.mxu0 %v161
  %198 = vmatprep.subr.bf16.mxu0 0
  %199 = vmatpush1.bf16.msra.mxu0 %v162
  %200 = vmatprep.subr.bf16.mxu0 0
  %201 = vmatpush1.bf16.msra.mxu0 %v163
  %202 = vmatprep.subr.bf16.mxu0 0
  %203 = vmatpush1.bf16.msra.mxu0 %v164
  %204 = vmatprep.subr.bf16.mxu0 0
  %205 = vmatpush1.bf16.msra.mxu0 %v165
  %206 = vmatprep.subr.bf16.mxu0 0
  %207 = vmatpush1.bf16.msra.mxu0 %v166
  %208 = vmatprep.subr.bf16.mxu0 0
  %209 = vmatpush1.bf16.msra.mxu0 %v167
  %210 = vmatprep.subr.bf16.mxu0 0
  %211 = vmatpush1.bf16.msra.mxu0 0
  %212 = vmatprep.subr.bf16.mxu0 0
  %213 = vmatpush1.bf16.msra.mxu0 0
  %214 = vmatprep.subr.bf16.mxu0 0
  %215 = vmatpush1.bf16.msra.mxu0 0
  %216 = vmatprep.subr.bf16.mxu0 0
  %217 = vmatpush1.bf16.msra.mxu0 0
  %218 = vmatprep.mubr.bf16.mxu0 %v181
  %219 = vmatmul.mubr.bf16.gmra.mrb[0].mxu0 %v80
  %v220 = vpop.f32.mrb[0].mxu0
  %v221 = vadd.f32 0.0, %v220
  %v222 = vpop.f32.mrb[0].mxu0
  %v223 = vpop.f32.mrb[0].mxu0
  %v224 = vadd.f32 0.0, %v223
  %v225 = vpop.f32.mrb[0].mxu0
  %226 = vmatprep.mubr.bf16.mxu0 %v184
  %227 = vmatmul.mubr.bf16.gmra.mrb[0].mxu0 %v82
  %v228 = vpop.f32.mrb[0].mxu0
  %v229 = vadd.f32 0.0, %v228
  %v230 = vpop.f32.mrb[0].mxu0
  %v231 = vpop.f32.mrb[0].mxu0
  %v232 = vadd.f32 0.0, %v231
  %v233 = vpop.f32.mrb[0].mxu0
  %234 = vdwg.mxu0
  %v235 = vld [vmem:[%s7] sm:$0xff]
  %v236 = vld [vmem:[%s7 + $0x8] sm:$0xff]
  %v237 = vld [vmem:[%s7 + $0x10] sm:$0xff]
  %v238 = vld [vmem:[%s7 + $0x18] sm:$0xff]
  %240 = vset.pattern.permute.xlu0 0
  %241 = vperm.xlu0 %240, %v235
  %v242 = vpop.permute.xlu0 %241
  %245 = vset.pattern.permute.xlu0 0
  %246 = vperm.xlu0 %245, %v236
  %v247 = vpop.permute.xlu0 %246
  %250 = vset.pattern.permute.xlu0 0
  %251 = vperm.xlu0 %250, %v237
  %v252 = vpop.permute.xlu0 %251
  %255 = vset.pattern.permute.xlu0 0
  %256 = vperm.xlu0 %255, %v238
  %v257 = vpop.permute.xlu0 %256
  %v259 = vmul.f32 %v221, %v242
  %v260 = vmul.f32 %v224, %v247
  %v261 = vmul.f32 %v229, %v252
  %v262 = vmul.f32 %v232, %v257
  %vm263 = vcmask 916480
  %v264 = vsel %vm263, %v259, 0.0
  %v265 = vsel %vm263, %v260, 0.0
  %v266 = vadd.f32 %v264, %v265
  %v267 = vsel %vm263, %v261, 0.0
  %v268 = vadd.f32 %v266, %v267
  %v269 = vsel %vm263, %v262, 0.0
  %v270 = vadd.f32 %v268, %v269
  %v271 = vrot.slane %v270, 4
  %v272 = vadd.f32 %v270, %v271
  %v273 = vrot.slane %v272, 2
  %v274 = vadd.f32 %v272, %v273
  %v275 = vrot.slane %v274, 1
  %v276 = vadd.f32 %v274, %v275
  %278 = vrot.lane.b32.xlu0 %v276, 120
  %v279 = vpop.permute.xlu0 %278
  %v281 = vadd.f32 %v276, %v279
  %282 = vrot.lane.b32.xlu0 %v276, 112
  %v283 = vpop.permute.xlu0 %282
  %v285 = vadd.f32 %v281, %v283
  %286 = vrot.lane.b32.xlu0 %v276, 104
  %v287 = vpop.permute.xlu0 %286
  %v289 = vadd.f32 %v285, %v287
  %290 = vrot.lane.b32.xlu0 %v276, 96
  %v291 = vpop.permute.xlu0 %290
  %v293 = vadd.f32 %v289, %v291
  %294 = vrot.lane.b32.xlu0 %v276, 88
  %v295 = vpop.permute.xlu0 %294
  %v297 = vadd.f32 %v293, %v295
  %298 = vrot.lane.b32.xlu0 %v276, 80
  %v299 = vpop.permute.xlu0 %298
  %v301 = vadd.f32 %v297, %v299
  %302 = vrot.lane.b32.xlu0 %v276, 72
  %v303 = vpop.permute.xlu0 %302
  %v305 = vadd.f32 %v301, %v303
  %306 = vrot.lane.b32.xlu0 %v276, 64
  %v307 = vpop.permute.xlu0 %306
  %v309 = vadd.f32 %v305, %v307
  %310 = vrot.lane.b32.xlu0 %v276, 56
  %v311 = vpop.permute.xlu0 %310
  %v313 = vadd.f32 %v309, %v311
  %314 = vrot.lane.b32.xlu0 %v276, 48
  %v315 = vpop.permute.xlu0 %314
  %v317 = vadd.f32 %v313, %v315
  %318 = vrot.lane.b32.xlu0 %v276, 40
  %v319 = vpop.permute.xlu0 %318
  %v321 = vadd.f32 %v317, %v319
  %322 = vrot.lane.b32.xlu0 %v276, 32
  %v323 = vpop.permute.xlu0 %322
  %v325 = vadd.f32 %v321, %v323
  %326 = vrot.lane.b32.xlu0 %v276, 24
  %v327 = vpop.permute.xlu0 %326
  %v329 = vadd.f32 %v325, %v327
  %v330 = vmul.f32 %v329, 0.0025510204
  %332 = vrot.lane.b32.xlu0 %v330, 8
  %v333 = vpop.permute.xlu0 %332
  %335 = vrot.lane.b32.xlu0 %v330, 16
  %v336 = vpop.permute.xlu0 %335
  %338 = vrot.lane.b32.xlu0 %v330, 24
  %v339 = vpop.permute.xlu0 %338
  %341 = vrot.lane.b32.xlu0 %v330, 32
  %v342 = vpop.permute.xlu0 %341
  %344 = vrot.lane.b32.xlu0 %v330, 40
  %v345 = vpop.permute.xlu0 %344
  %347 = vrot.lane.b32.xlu0 %v330, 48
  %v348 = vpop.permute.xlu0 %347
  %350 = vrot.lane.b32.xlu0 %v330, 56
  %v351 = vpop.permute.xlu0 %350
  %353 = vrot.lane.b32.xlu0 %v330, 64
  %v354 = vpop.permute.xlu0 %353
  %356 = vrot.lane.b32.xlu0 %v330, 72
  %v357 = vpop.permute.xlu0 %356
  %359 = vrot.lane.b32.xlu0 %v330, 80
  %v360 = vpop.permute.xlu0 %359
  %362 = vrot.lane.b32.xlu0 %v330, 88
  %v363 = vpop.permute.xlu0 %362
  %365 = vrot.lane.b32.xlu0 %v330, 96
  %v366 = vpop.permute.xlu0 %365
  %368 = vrot.lane.b32.xlu0 %v330, 104
  %v369 = vpop.permute.xlu0 %368
  %vm371 = vcmask 64512
  %v372 = vsel %vm371, %v330, %v333
  %vm373 = vcmask 130048
  %v374 = vsel %vm373, %v372, %v336
  %vm375 = vcmask 195584
  %v376 = vsel %vm375, %v374, %v339
  %vm377 = vcmask 261120
  %v378 = vsel %vm377, %v376, %v342
  %vm379 = vcmask 326656
  %v380 = vsel %vm379, %v378, %v345
  %vm381 = vcmask 392192
  %v382 = vsel %vm381, %v380, %v348
  %vm383 = vcmask 457728
  %v384 = vsel %vm383, %v382, %v351
  %v385 = vsel %vm75, %v384, %v354
  %vm386 = vcmask 588800
  %v387 = vsel %vm386, %v385, %v357
  %vm388 = vcmask 654336
  %v389 = vsel %vm388, %v387, %v360
  %vm390 = vcmask 719872
  %v391 = vsel %vm390, %v389, %v363
  %vm392 = vcmask 785408
  %v393 = vsel %vm392, %v391, %v366
  %vm394 = vcmask 850944
  %v395 = vsel %vm394, %v393, %v369
  %v396 = vlaneseq
  %v397 = vshrl.u32 %v396, 7
  %v398 = vsub.s32 0, %v397
  %v399 = vrot.slane %v395, %v398
  %v400 = vsub.f32 %v221, %v399
  %v401 = vsub.f32 %v224, %v399
  %v402 = vsub.f32 %v229, %v399
  %v403 = vsub.f32 %v232, %v399
  %v404 = vmul.f32 %v400, %v242
  %v405 = vmul.f32 %v401, %v247
  %v406 = vmul.f32 %v402, %v252
  %v407 = vmul.f32 %v403, %v257
  %v408 = vmul.f32 %v404, %v404
  %v409 = vmul.f32 %v405, %v405
  %v410 = vmul.f32 %v406, %v406
  %v411 = vmul.f32 %v407, %v407
  %v412 = vsel %vm263, %v408, 0.0
  %v413 = vsel %vm263, %v409, 0.0
  %v414 = vadd.f32 %v412, %v413
  %v415 = vsel %vm263, %v410, 0.0
  %v416 = vadd.f32 %v414, %v415
  %v417 = vsel %vm263, %v411, 0.0
  %v418 = vadd.f32 %v416, %v417
  %v419 = vrot.slane %v418, 4
  %v420 = vadd.f32 %v418, %v419
  %v421 = vrot.slane %v420, 2
  %v422 = vadd.f32 %v420, %v421
  %v423 = vrot.slane %v422, 1
  %v424 = vadd.f32 %v422, %v423
  %426 = vrot.lane.b32.xlu0 %v424, 120
  %v427 = vpop.permute.xlu0 %426
  %v429 = vadd.f32 %v424, %v427
  %430 = vrot.lane.b32.xlu0 %v424, 112
  %v431 = vpop.permute.xlu0 %430
  %v433 = vadd.f32 %v429, %v431
  %434 = vrot.lane.b32.xlu0 %v424, 104
  %v435 = vpop.permute.xlu0 %434
  %v437 = vadd.f32 %v433, %v435
  %438 = vrot.lane.b32.xlu0 %v424, 96
  %v439 = vpop.permute.xlu0 %438
  %v441 = vadd.f32 %v437, %v439
  %442 = vrot.lane.b32.xlu0 %v424, 88
  %v443 = vpop.permute.xlu0 %442
  %v445 = vadd.f32 %v441, %v443
  %446 = vrot.lane.b32.xlu0 %v424, 80
  %v447 = vpop.permute.xlu0 %446
  %v449 = vadd.f32 %v445, %v447
  %450 = vrot.lane.b32.xlu0 %v424, 72
  %v451 = vpop.permute.xlu0 %450
  %v453 = vadd.f32 %v449, %v451
  %454 = vrot.lane.b32.xlu0 %v424, 64
  %v455 = vpop.permute.xlu0 %454
  %v457 = vadd.f32 %v453, %v455
  %458 = vrot.lane.b32.xlu0 %v424, 56
  %v459 = vpop.permute.xlu0 %458
  %v461 = vadd.f32 %v457, %v459
  %462 = vrot.lane.b32.xlu0 %v424, 48
  %v463 = vpop.permute.xlu0 %462
  %v465 = vadd.f32 %v461, %v463
  %466 = vrot.lane.b32.xlu0 %v424, 40
  %v467 = vpop.permute.xlu0 %466
  %v469 = vadd.f32 %v465, %v467
  %470 = vrot.lane.b32.xlu0 %v424, 32
  %v471 = vpop.permute.xlu0 %470
  %v473 = vadd.f32 %v469, %v471
  %474 = vrot.lane.b32.xlu0 %v424, 24
  %v475 = vpop.permute.xlu0 %474
  %v477 = vadd.f32 %v473, %v475
  %v478 = vmul.f32 %v477, 0.0025510204
  %v479 = vadd.f32 %v478, 1e-05
  %v480 = vrsqrt.pop %v479
  %v481 = vld [vmem:[%s3] sm:$0x1]
  %v482 = vmul.f32 %v481, %v480
  %v483 = vld [vmem:[%s4] sm:$0x1]
  %v484 = vmul.f32 %v330, %v482
  %v485 = vsub.f32 %v483, %v484
  %v487 = vlaneseq
  %v488 = vshrl.u32 %v487, 7
  %v489 = vsub.s32 0, %v488
  %v490 = vrot.slane %v482, %v489
  %491 = vrot.lane.b32.xlu0 %v490, 8
  %v492 = vpop.permute.xlu0 %491
  %494 = vrot.lane.b32.xlu0 %v490, 16
  %v495 = vpop.permute.xlu0 %494
  %497 = vrot.lane.b32.xlu0 %v490, 24
  %v498 = vpop.permute.xlu0 %497
  %500 = vrot.lane.b32.xlu0 %v490, 32
  %v501 = vpop.permute.xlu0 %500
  %503 = vrot.lane.b32.xlu0 %v490, 40
  %v504 = vpop.permute.xlu0 %503
  %506 = vrot.lane.b32.xlu0 %v490, 48
  %v507 = vpop.permute.xlu0 %506
  %509 = vrot.lane.b32.xlu0 %v490, 56
  %v510 = vpop.permute.xlu0 %509
  %512 = vrot.lane.b32.xlu0 %v490, 64
  %v513 = vpop.permute.xlu0 %512
  %515 = vrot.lane.b32.xlu0 %v490, 72
  %v516 = vpop.permute.xlu0 %515
  %518 = vrot.lane.b32.xlu0 %v490, 80
  %v519 = vpop.permute.xlu0 %518
  %521 = vrot.lane.b32.xlu0 %v490, 88
  %v522 = vpop.permute.xlu0 %521
  %524 = vrot.lane.b32.xlu0 %v490, 96
  %v525 = vpop.permute.xlu0 %524
  %527 = vrot.lane.b32.xlu0 %v490, 104
  %v528 = vpop.permute.xlu0 %527
  %v530 = vsel %vm371, %v482, %v492
  %v531 = vsel %vm373, %v530, %v495
  %v532 = vsel %vm375, %v531, %v498
  %v533 = vsel %vm377, %v532, %v501
  %v534 = vsel %vm379, %v533, %v504
  %v535 = vsel %vm381, %v534, %v507
  %v536 = vsel %vm383, %v535, %v510
  %v537 = vsel %vm75, %v536, %v513
  %v538 = vsel %vm386, %v537, %v516
  %v539 = vsel %vm388, %v538, %v519
  %v540 = vsel %vm390, %v539, %v522
  %v541 = vsel %vm392, %v540, %v525
  %v542 = vsel %vm394, %v541, %v528
  %v544 = vlaneseq
  %v545 = vshrl.u32 %v544, 7
  %v546 = vsub.s32 0, %v545
  %v547 = vrot.slane %v485, %v546
  %548 = vrot.lane.b32.xlu0 %v547, 8
  %v549 = vpop.permute.xlu0 %548
  %551 = vrot.lane.b32.xlu0 %v547, 16
  %v552 = vpop.permute.xlu0 %551
  %554 = vrot.lane.b32.xlu0 %v547, 24
  %v555 = vpop.permute.xlu0 %554
  %557 = vrot.lane.b32.xlu0 %v547, 32
  %v558 = vpop.permute.xlu0 %557
  %560 = vrot.lane.b32.xlu0 %v547, 40
  %v561 = vpop.permute.xlu0 %560
  %563 = vrot.lane.b32.xlu0 %v547, 48
  %v564 = vpop.permute.xlu0 %563
  %566 = vrot.lane.b32.xlu0 %v547, 56
  %v567 = vpop.permute.xlu0 %566
  %569 = vrot.lane.b32.xlu0 %v547, 64
  %v570 = vpop.permute.xlu0 %569
  %572 = vrot.lane.b32.xlu0 %v547, 72
  %v573 = vpop.permute.xlu0 %572
  %575 = vrot.lane.b32.xlu0 %v547, 80
  %v576 = vpop.permute.xlu0 %575
  %578 = vrot.lane.b32.xlu0 %v547, 88
  %v579 = vpop.permute.xlu0 %578
  %581 = vrot.lane.b32.xlu0 %v547, 96
  %v582 = vpop.permute.xlu0 %581
  %584 = vrot.lane.b32.xlu0 %v547, 104
  %v585 = vpop.permute.xlu0 %584
  %v587 = vsel %vm371, %v485, %v549
  %v588 = vsel %vm373, %v587, %v552
  %v589 = vsel %vm375, %v588, %v555
  %v590 = vsel %vm377, %v589, %v558
  %v591 = vsel %vm379, %v590, %v561
  %v592 = vsel %vm381, %v591, %v564
  %v593 = vsel %vm383, %v592, %v567
  %v594 = vsel %vm75, %v593, %v570
  %v595 = vsel %vm386, %v594, %v573
  %v596 = vsel %vm388, %v595, %v576
  %v597 = vsel %vm390, %v596, %v579
  %v598 = vsel %vm392, %v597, %v582
  %v599 = vsel %vm394, %v598, %v585
  %v600 = vlaneseq
  %v601 = vshrl.u32 %v600, 7
  %v602 = vsub.s32 0, %v601
  %v603 = vrot.slane %v542, %v602
  %v604 = vmul.f32 %v221, %v603
  %v605 = vmul.f32 %v224, %v603
  %v606 = vmul.f32 %v229, %v603
  %v607 = vmul.f32 %v232, %v603
  %v608 = vlaneseq
  %v609 = vshrl.u32 %v608, 7
  %v610 = vsub.s32 0, %v609
  %v611 = vrot.slane %v599, %v610
  %v612 = vadd.f32 %v604, %v611
  %v613 = vadd.f32 %v605, %v611
  %v614 = vadd.f32 %v606, %v611
  %v615 = vadd.f32 %v607, %v611
  %v616 = vmax.f32 %v612, 0.0
  %v617 = vmax.f32 %v613, 0.0
  %v618 = vmax.f32 %v614, 0.0
  %v619 = vmax.f32 %v615, 0.0
  %v620 = vrot.slane %v616, 1
  %v621 = vrot.slane %v617, 1
  %v622 = vrot.slane %v618, 1
  %v623 = vrot.slane %v619, 1
  %v624 = vsel %vm45, %v622, %v623
  %v625 = vsel %vm45, %v621, %v622
  %v626 = vsel %vm45, %v620, %v621
  %v627 = vsel %vm45, %v623, %v620
  %v628 = vrot.slane %v616, 2
  %v629 = vrot.slane %v617, 2
  %v630 = vrot.slane %v618, 2
  %v631 = vrot.slane %v619, 2
  %v632 = vsel %vm54, %v630, %v631
  %v633 = vsel %vm54, %v629, %v630
  %v634 = vsel %vm54, %v628, %v629
  %v635 = vsel %vm54, %v631, %v628
  %640 = vrot.lane.b32.xlu0 %v626, 112
  %v641 = vpop.permute.xlu0 %640
  %642 = vrot.lane.b32.xlu0 %v625, 112
  %v643 = vpop.permute.xlu0 %642
  %644 = vrot.lane.b32.xlu0 %v624, 112
  %v645 = vpop.permute.xlu0 %644
  %646 = vrot.lane.b32.xlu0 %v627, 112
  %v647 = vpop.permute.xlu0 %646
  %656 = vrot.lane.b32.xlu0 %v634, 96
  %v657 = vpop.permute.xlu0 %656
  %658 = vrot.lane.b32.xlu0 %v633, 96
  %v659 = vpop.permute.xlu0 %658
  %660 = vrot.lane.b32.xlu0 %v632, 96
  %v661 = vpop.permute.xlu0 %660
  %662 = vrot.lane.b32.xlu0 %v635, 96
  %v663 = vpop.permute.xlu0 %662
  %v668 = vsel %vm263, %v616, %v641
  %v669 = vsel %vm263, %v617, %v643
  %v670 = vsel %vm263, %v618, %v645
  %v671 = vsel %vm263, %v619, %v647
  %v672 = vsel %vm392, %v641, %v657
  %v673 = vsel %vm392, %v643, %v659
  %v674 = vsel %vm392, %v645, %v661
  %v675 = vsel %vm392, %v647, %v663
  %v676 = vpack.c.bf16 %v669, %v668
  %v677 = vpack.c.bf16 %v673, %v672
  %v678 = vpack.c.bf16 %v659, %v657
  %v679 = vpack.c.bf16 %v671, %v670
  %v680 = vpack.c.bf16 %v675, %v674
  %v681 = vpack.c.bf16 %v663, %v661
  %v682 = vld [vmem:[%s2] sm:$0xf]
  %v683 = vld [vmem:[%s2 + $0x4] sm:$0xf]
  %v684 = vld [vmem:[%s2 + $0x8] sm:$0xf]
  %v685 = vld [vmem:[%s2 + $0xc] sm:$0xf]
  %v686 = vld [vmem:[%s2 + $0x10] sm:$0xf]
  %v687 = vld [vmem:[%s2 + $0x14] sm:$0xf]
  %v688 = vld [vmem:[%s2 + $0x18] sm:$0xf]
  %v689 = vld [vmem:[%s2 + $0x1c] sm:$0xf]
  %v690 = vld [vmem:[%s2 + $0x20] sm:$0xf]
  %v691 = vld [vmem:[%s2 + $0x24] sm:$0xf]
  %v692 = vld [vmem:[%s2 + $0x28] sm:$0xf]
  %v693 = vld [vmem:[%s2 + $0x2c] sm:$0xf]
  %v694 = vld [vmem:[%s2 + $0x30] sm:$0xf]
  %v695 = vld [vmem:[%s2 + $0x34] sm:$0xf]
  %v696 = vld [vmem:[%s2 + $0x38] sm:$0xf]
  %v697 = vld [vmem:[%s2 + $0x3c] sm:$0xf]
  %v698 = vld [vmem:[%s2 + $0x40] sm:$0xf]
  %v699 = vld [vmem:[%s2 + $0x44] sm:$0xf]
  %v700 = vld [vmem:[%s2 + $0x48] sm:$0xf]
  %v701 = vld [vmem:[%s2 + $0x4c] sm:$0xf]
  %v702 = vld [vmem:[%s2 + $0x50] sm:$0xf]
  %v703 = vld [vmem:[%s2 + $0x54] sm:$0xf]
  %v704 = vld [vmem:[%s2 + $0x58] sm:$0xf]
  %v705 = vld [vmem:[%s2 + $0x5c] sm:$0xf]
  %v706 = vld [vmem:[%s2 + $0x60] sm:$0xf]
  %v707 = vld [vmem:[%s2 + $0x64] sm:$0xf]
  %v708 = vld [vmem:[%s2 + $0x68] sm:$0xf]
  %v709 = vld [vmem:[%s2 + $0x6c] sm:$0xf]
  %v710 = vld [vmem:[%s2 + $0x70] sm:$0xf]
  %v711 = vld [vmem:[%s2 + $0x74] sm:$0xf]
  %v712 = vld [vmem:[%s2 + $0x78] sm:$0xf]
  %v713 = vld [vmem:[%s2 + $0x7c] sm:$0xf]
  %v714 = vld [vmem:[%s2 + $0x80] sm:$0xf]
  %v715 = vld [vmem:[%s2 + $0x84] sm:$0xf]
  %v716 = vld [vmem:[%s2 + $0x88] sm:$0xf]
  %v717 = vld [vmem:[%s2 + $0x8c] sm:$0xf]
  %v718 = vld [vmem:[%s2 + $0x90] sm:$0xf]
  %v719 = vld [vmem:[%s2 + $0x94] sm:$0xf]
  %v720 = vld [vmem:[%s2 + $0x98] sm:$0xf]
  %v721 = vld [vmem:[%s2 + $0x9c] sm:$0xf]
  %v722 = vld [vmem:[%s2 + $0xa0] sm:$0xf]
  %v723 = vld [vmem:[%s2 + $0xa4] sm:$0xf]
  %v766 = vunpack.c.l.b16 %v682
  %v767 = vunpack.c.l.b16 %v683
  %v768 = vunpack.c.l.b16 %v684
  %v769 = vunpack.c.l.b16 %v685
  %v770 = vunpack.c.l.b16 %v686
  %v771 = vunpack.c.l.b16 %v687
  %v772 = vunpack.c.l.b16 %v688
  %v773 = vunpack.c.l.b16 %v689
  %v774 = vunpack.c.l.b16 %v690
  %v775 = vunpack.c.l.b16 %v691
  %v776 = vunpack.c.l.b16 %v692
  %v777 = vunpack.c.l.b16 %v693
  %v778 = vunpack.c.l.b16 %v694
  %v779 = vunpack.c.l.b16 %v695
  %v780 = vunpack.c.l.b16 %v696
  %v781 = vunpack.c.l.b16 %v697
  %v782 = vunpack.c.l.b16 %v698
  %v783 = vunpack.c.l.b16 %v699
  %v784 = vunpack.c.l.b16 %v700
  %v785 = vunpack.c.l.b16 %v701
  %v786 = vunpack.c.l.b16 %v702
  %v787 = vunpack.c.l.b16 %v703
  %v788 = vunpack.c.l.b16 %v704
  %v789 = vunpack.c.l.b16 %v705
  %v790 = vunpack.c.l.b16 %v706
  %v791 = vunpack.c.l.b16 %v707
  %v792 = vunpack.c.l.b16 %v708
  %v793 = vunpack.c.l.b16 %v709
  %v794 = vunpack.c.l.b16 %v710
  %v795 = vunpack.c.l.b16 %v711
  %v796 = vunpack.c.l.b16 %v712
  %v797 = vunpack.c.l.b16 %v713
  %v798 = vunpack.c.l.b16 %v714
  %v799 = vunpack.c.l.b16 %v715
  %v800 = vunpack.c.l.b16 %v716
  %v801 = vunpack.c.l.b16 %v717
  %v802 = vunpack.c.l.b16 %v718
  %v803 = vunpack.c.l.b16 %v719
  %v804 = vunpack.c.l.b16 %v720
  %v805 = vunpack.c.l.b16 %v721
  %v806 = vunpack.c.l.b16 %v722
  %v807 = vunpack.c.l.b16 %v723
  %v808 = vpack.c.b16 %v767, %v766
  %v809 = vpack.c.b16 %v769, %v768
  %v810 = vpack.c.b16 %v771, %v770
  %v811 = vpack.c.b16 %v773, %v772
  %v812 = vpack.c.b16 %v775, %v774
  %v813 = vpack.c.b16 %v777, %v776
  %v814 = vpack.c.b16 %v779, %v778
  %v815 = vpack.c.b16 %v781, %v780
  %v816 = vpack.c.b16 %v783, %v782
  %v817 = vpack.c.b16 %v785, %v784
  %v818 = vpack.c.b16 %v787, %v786
  %v819 = vpack.c.b16 %v789, %v788
  %v820 = vpack.c.b16 %v791, %v790
  %v821 = vpack.c.b16 %v793, %v792
  %v822 = vpack.c.b16 %v795, %v794
  %v823 = vpack.c.b16 %v797, %v796
  %v824 = vpack.c.b16 %v799, %v798
  %v825 = vpack.c.b16 %v801, %v800
  %v826 = vpack.c.b16 %v803, %v802
  %v827 = vpack.c.b16 %v805, %v804
  %v828 = vpack.c.b16 %v807, %v806
  %v851 = vsel %vm388, %v678, 0
  %v854 = vsel %vm388, %v681, 0
  %856 = vmatprep.subr.bf16.mxu0 0
  %857 = vmatpush1.bf16.msra.mxu0 %v808
  %858 = vmatprep.subr.bf16.mxu0 0
  %859 = vmatpush1.bf16.msra.mxu0 %v809
  %860 = vmatprep.subr.bf16.mxu0 0
  %861 = vmatpush1.bf16.msra.mxu0 %v810
  %862 = vmatprep.subr.bf16.mxu0 0
  %863 = vmatpush1.bf16.msra.mxu0 %v811
  %864 = vmatprep.subr.bf16.mxu0 0
  %865 = vmatpush1.bf16.msra.mxu0 %v812
  %866 = vmatprep.subr.bf16.mxu0 0
  %867 = vmatpush1.bf16.msra.mxu0 %v813
  %868 = vmatprep.subr.bf16.mxu0 0
  %869 = vmatpush1.bf16.msra.mxu0 %v814
  %870 = vmatprep.subr.bf16.mxu0 0
  %871 = vmatpush1.bf16.msra.mxu0 %v815
  %872 = vmatprep.subr.bf16.mxu0 0
  %873 = vmatpush1.bf16.msra.mxu0 %v816
  %874 = vmatprep.subr.bf16.mxu0 0
  %875 = vmatpush1.bf16.msra.mxu0 %v817
  %876 = vmatprep.subr.bf16.mxu0 0
  %877 = vmatpush1.bf16.msra.mxu0 %v818
  %878 = vmatprep.subr.bf16.mxu0 0
  %879 = vmatpush1.bf16.msra.mxu0 %v819
  %880 = vmatprep.subr.bf16.mxu0 0
  %881 = vmatpush1.bf16.msra.mxu0 %v820
  %882 = vmatprep.subr.bf16.mxu0 0
  %883 = vmatpush1.bf16.msra.mxu0 %v821
  %884 = vmatprep.subr.bf16.mxu0 0
  %885 = vmatpush1.bf16.msra.mxu0 %v822
  %886 = vmatprep.subr.bf16.mxu0 0
  %887 = vmatpush1.bf16.msra.mxu0 %v823
  %888 = vmatprep.mubr.bf16.mxu0 %v677
  %889 = vmatmul.mubr.bf16.gmra.mrb[0].mxu0 %v676
  %v890 = vpop.f32.mrb[0].mxu0
  %v891 = vadd.f32 0.0, %v890
  %v892 = vpop.f32.mrb[0].mxu0
  %v893 = vpop.f32.mrb[0].mxu0
  %v894 = vadd.f32 0.0, %v893
  %v895 = vpop.f32.mrb[0].mxu0
  %896 = vmatprep.mubr.bf16.mxu0 %v680
  %897 = vmatmul.mubr.bf16.gmra.mrb[0].mxu0 %v679
  %v898 = vpop.f32.mrb[0].mxu0
  %v899 = vadd.f32 0.0, %v898
  %v900 = vpop.f32.mrb[0].mxu0
  %v901 = vpop.f32.mrb[0].mxu0
  %v902 = vadd.f32 0.0, %v901
  %v903 = vpop.f32.mrb[0].mxu0
  %904 = vdwg.mxu0
  %905 = vmatprep.subr.bf16.mxu0 0
  %906 = vmatpush1.bf16.msra.mxu0 %v824
  %907 = vmatprep.subr.bf16.mxu0 0
  %908 = vmatpush1.bf16.msra.mxu0 %v825
  %909 = vmatprep.subr.bf16.mxu0 0
  %910 = vmatpush1.bf16.msra.mxu0 %v826
  %911 = vmatprep.subr.bf16.mxu0 0
  %912 = vmatpush1.bf16.msra.mxu0 %v827
  %913 = vmatprep.subr.bf16.mxu0 0
  %914 = vmatpush1.bf16.msra.mxu0 %v828
  %915 = vmatprep.subr.bf16.mxu0 0
  %916 = vmatpush1.bf16.msra.mxu0 0
  %917 = vmatprep.subr.bf16.mxu0 0
  %918 = vmatpush1.bf16.msra.mxu0 0
  %919 = vmatprep.subr.bf16.mxu0 0
  %920 = vmatpush1.bf16.msra.mxu0 0
  %921 = vmatprep.subr.bf16.mxu0 0
  %922 = vmatpush1.bf16.msra.mxu0 0
  %923 = vmatprep.subr.bf16.mxu0 0
  %924 = vmatpush1.bf16.msra.mxu0 0
  %925 = vmatprep.subr.bf16.mxu0 0
  %926 = vmatpush1.bf16.msra.mxu0 0
  %927 = vmatprep.subr.bf16.mxu0 0
  %928 = vmatpush1.bf16.msra.mxu0 0
  %929 = vmatprep.subr.bf16.mxu0 0
  %930 = vmatpush1.bf16.msra.mxu0 0
  %931 = vmatprep.subr.bf16.mxu0 0
  %932 = vmatpush1.bf16.msra.mxu0 0
  %933 = vmatprep.subr.bf16.mxu0 0
  %934 = vmatpush1.bf16.msra.mxu0 0
  %935 = vmatprep.subr.bf16.mxu0 0
  %936 = vmatpush1.bf16.msra.mxu0 0
  %937 = vmatprep.mubr.bf16.mxu0 0
  %938 = vmatmul.mubr.bf16.gmra.mrb[0].mxu0 %v851
  %v939 = vpop.f32.mrb[0].mxu0
  %v940 = vadd.f32 %v891, %v939
  %v941 = vpop.f32.mrb[0].mxu0
  %v942 = vpop.f32.mrb[0].mxu0
  %v943 = vadd.f32 %v894, %v942
  %v944 = vpop.f32.mrb[0].mxu0
  %945 = vmatprep.mubr.bf16.mxu0 0
  %946 = vmatmul.mubr.bf16.gmra.mrb[0].mxu0 %v854
  %v947 = vpop.f32.mrb[0].mxu0
  %v948 = vadd.f32 %v899, %v947
  %v949 = vpop.f32.mrb[0].mxu0
  %v950 = vpop.f32.mrb[0].mxu0
  %v951 = vadd.f32 %v902, %v950
  %v952 = vpop.f32.mrb[0].mxu0
  %953 = vdwg.mxu0
  %v954 = vld [vmem:[%s8] sm:$0xff]
  %v955 = vld [vmem:[%s8 + $0x8] sm:$0xff]
  %v956 = vld [vmem:[%s8 + $0x10] sm:$0xff]
  %v957 = vld [vmem:[%s8 + $0x18] sm:$0xff]
  %959 = vset.pattern.permute.xlu0 0
  %960 = vperm.xlu0 %959, %v954
  %v961 = vpop.permute.xlu0 %960
  %964 = vset.pattern.permute.xlu0 0
  %965 = vperm.xlu0 %964, %v955
  %v966 = vpop.permute.xlu0 %965
  %969 = vset.pattern.permute.xlu0 0
  %970 = vperm.xlu0 %969, %v956
  %v971 = vpop.permute.xlu0 %970
  %974 = vset.pattern.permute.xlu0 0
  %975 = vperm.xlu0 %974, %v957
  %v976 = vpop.permute.xlu0 %975
  %v978 = vmul.f32 %v940, %v961
  %v979 = vmul.f32 %v943, %v966
  %v980 = vmul.f32 %v948, %v971
  %v981 = vmul.f32 %v951, %v976
  %v982 = vadd.f32 %v978, %v979
  %v983 = vadd.f32 %v982, %v980
  %v984 = vadd.f32 %v983, %v981
  %v985 = vrot.slane %v984, 4
  %v986 = vadd.f32 %v984, %v985
  %v987 = vrot.slane %v986, 2
  %v988 = vadd.f32 %v986, %v987
  %v989 = vrot.slane %v988, 1
  %v990 = vadd.f32 %v988, %v989
  %992 = vrot.lane.b32.xlu0 %v990, 120
  %v993 = vpop.permute.xlu0 %992
  %v995 = vadd.f32 %v990, %v993
  %996 = vrot.lane.b32.xlu0 %v990, 112
  %v997 = vpop.permute.xlu0 %996
  %v999 = vadd.f32 %v995, %v997
  %1000 = vrot.lane.b32.xlu0 %v990, 104
  %v1001 = vpop.permute.xlu0 %1000
  %v1003 = vadd.f32 %v999, %v1001
  %1004 = vrot.lane.b32.xlu0 %v990, 96
  %v1005 = vpop.permute.xlu0 %1004
  %v1007 = vadd.f32 %v1003, %v1005
  %1008 = vrot.lane.b32.xlu0 %v990, 88
  %v1009 = vpop.permute.xlu0 %1008
  %v1011 = vadd.f32 %v1007, %v1009
  %1012 = vrot.lane.b32.xlu0 %v990, 80
  %v1013 = vpop.permute.xlu0 %1012
  %v1015 = vadd.f32 %v1011, %v1013
  %1016 = vrot.lane.b32.xlu0 %v990, 72
  %v1017 = vpop.permute.xlu0 %1016
  %v1019 = vadd.f32 %v1015, %v1017
  %1020 = vrot.lane.b32.xlu0 %v990, 64
  %v1021 = vpop.permute.xlu0 %1020
  %v1023 = vadd.f32 %v1019, %v1021
  %1024 = vrot.lane.b32.xlu0 %v990, 56
  %v1025 = vpop.permute.xlu0 %1024
  %v1027 = vadd.f32 %v1023, %v1025
  %1028 = vrot.lane.b32.xlu0 %v990, 48
  %v1029 = vpop.permute.xlu0 %1028
  %v1031 = vadd.f32 %v1027, %v1029
  %1032 = vrot.lane.b32.xlu0 %v990, 40
  %v1033 = vpop.permute.xlu0 %1032
  %v1035 = vadd.f32 %v1031, %v1033
  %v1036 = vmul.f32 %v1035, 0.0034722222
  %1038 = vrot.lane.b32.xlu0 %v1036, 8
  %v1039 = vpop.permute.xlu0 %1038
  %1041 = vrot.lane.b32.xlu0 %v1036, 16
  %v1042 = vpop.permute.xlu0 %1041
  %1044 = vrot.lane.b32.xlu0 %v1036, 24
  %v1045 = vpop.permute.xlu0 %1044
  %1047 = vrot.lane.b32.xlu0 %v1036, 32
  %v1048 = vpop.permute.xlu0 %1047
  %1050 = vrot.lane.b32.xlu0 %v1036, 40
  %v1051 = vpop.permute.xlu0 %1050
  %1053 = vrot.lane.b32.xlu0 %v1036, 48
  %v1054 = vpop.permute.xlu0 %1053
  %1056 = vrot.lane.b32.xlu0 %v1036, 56
  %v1057 = vpop.permute.xlu0 %1056
  %1059 = vrot.lane.b32.xlu0 %v1036, 64
  %v1060 = vpop.permute.xlu0 %1059
  %1062 = vrot.lane.b32.xlu0 %v1036, 72
  %v1063 = vpop.permute.xlu0 %1062
  %1065 = vrot.lane.b32.xlu0 %v1036, 80
  %v1066 = vpop.permute.xlu0 %1065
  %1068 = vrot.lane.b32.xlu0 %v1036, 88
  %v1069 = vpop.permute.xlu0 %1068
  %1071 = vrot.lane.b32.xlu0 %v1036, 96
  %v1072 = vpop.permute.xlu0 %1071
  %1074 = vrot.lane.b32.xlu0 %v1036, 104
  %v1075 = vpop.permute.xlu0 %1074
  %1077 = vrot.lane.b32.xlu0 %v1036, 112
  %v1078 = vpop.permute.xlu0 %1077
  %1080 = vrot.lane.b32.xlu0 %v1036, 120
  %v1081 = vpop.permute.xlu0 %1080
  %v1083 = vsel %vm371, %v1036, %v1039
  %v1084 = vsel %vm373, %v1083, %v1042
  %v1085 = vsel %vm375, %v1084, %v1045
  %v1086 = vsel %vm377, %v1085, %v1048
  %v1087 = vsel %vm379, %v1086, %v1051
  %v1088 = vsel %vm381, %v1087, %v1054
  %v1089 = vsel %vm383, %v1088, %v1057
  %v1090 = vsel %vm75, %v1089, %v1060
  %v1091 = vsel %vm386, %v1090, %v1063
  %v1092 = vsel %vm388, %v1091, %v1066
  %v1093 = vsel %vm390, %v1092, %v1069
  %v1094 = vsel %vm392, %v1093, %v1072
  %v1095 = vsel %vm394, %v1094, %v1075
  %v1096 = vsel %vm263, %v1095, %v1078
  %vm1097 = vcmask 982016
  %v1098 = vsel %vm1097, %v1096, %v1081
  %v1099 = vlaneseq
  %v1100 = vshrl.u32 %v1099, 7
  %v1101 = vsub.s32 0, %v1100
  %v1102 = vrot.slane %v1098, %v1101
  %v1103 = vsub.f32 %v940, %v1102
  %v1104 = vsub.f32 %v943, %v1102
  %v1105 = vsub.f32 %v948, %v1102
  %v1106 = vsub.f32 %v951, %v1102
  %v1107 = vmul.f32 %v1103, %v961
  %v1108 = vmul.f32 %v1104, %v966
  %v1109 = vmul.f32 %v1105, %v971
  %v1110 = vmul.f32 %v1106, %v976
  %v1111 = vmul.f32 %v1107, %v1107
  %v1112 = vmul.f32 %v1108, %v1108
  %v1113 = vmul.f32 %v1109, %v1109
  %v1114 = vmul.f32 %v1110, %v1110
  %v1115 = vadd.f32 %v1111, %v1112
  %v1116 = vadd.f32 %v1115, %v1113
  %v1117 = vadd.f32 %v1116, %v1114
  %v1118 = vrot.slane %v1117, 4
  %v1119 = vadd.f32 %v1117, %v1118
  %v1120 = vrot.slane %v1119, 2
  %v1121 = vadd.f32 %v1119, %v1120
  %v1122 = vrot.slane %v1121, 1
  %v1123 = vadd.f32 %v1121, %v1122
  %1125 = vrot.lane.b32.xlu0 %v1123, 120
  %v1126 = vpop.permute.xlu0 %1125
  %v1128 = vadd.f32 %v1123, %v1126
  %1129 = vrot.lane.b32.xlu0 %v1123, 112
  %v1130 = vpop.permute.xlu0 %1129
  %v1132 = vadd.f32 %v1128, %v1130
  %1133 = vrot.lane.b32.xlu0 %v1123, 104
  %v1134 = vpop.permute.xlu0 %1133
  %v1136 = vadd.f32 %v1132, %v1134
  %1137 = vrot.lane.b32.xlu0 %v1123, 96
  %v1138 = vpop.permute.xlu0 %1137
  %v1140 = vadd.f32 %v1136, %v1138
  %1141 = vrot.lane.b32.xlu0 %v1123, 88
  %v1142 = vpop.permute.xlu0 %1141
  %v1144 = vadd.f32 %v1140, %v1142
  %1145 = vrot.lane.b32.xlu0 %v1123, 80
  %v1146 = vpop.permute.xlu0 %1145
  %v1148 = vadd.f32 %v1144, %v1146
  %1149 = vrot.lane.b32.xlu0 %v1123, 72
  %v1150 = vpop.permute.xlu0 %1149
  %v1152 = vadd.f32 %v1148, %v1150
  %1153 = vrot.lane.b32.xlu0 %v1123, 64
  %v1154 = vpop.permute.xlu0 %1153
  %v1156 = vadd.f32 %v1152, %v1154
  %1157 = vrot.lane.b32.xlu0 %v1123, 56
  %v1158 = vpop.permute.xlu0 %1157
  %v1160 = vadd.f32 %v1156, %v1158
  %1161 = vrot.lane.b32.xlu0 %v1123, 48
  %v1162 = vpop.permute.xlu0 %1161
  %v1164 = vadd.f32 %v1160, %v1162
  %1165 = vrot.lane.b32.xlu0 %v1123, 40
  %v1166 = vpop.permute.xlu0 %1165
  %v1168 = vadd.f32 %v1164, %v1166
  %v1169 = vmul.f32 %v1168, 0.0034722222
  %v1170 = vadd.f32 %v1169, 1e-05
  %v1171 = vrsqrt.pop %v1170
  %v1172 = vld [vmem:[%s5] sm:$0x1]
  %v1173 = vmul.f32 %v1172, %v1171
  %v1174 = vld [vmem:[%s6] sm:$0x1]
  %v1175 = vmul.f32 %v1036, %v1173
  %v1176 = vsub.f32 %v1174, %v1175
  %v1178 = vlaneseq
  %v1179 = vshrl.u32 %v1178, 7
  %v1180 = vsub.s32 0, %v1179
  %v1181 = vrot.slane %v1173, %v1180
  %1182 = vrot.lane.b32.xlu0 %v1181, 8
  %v1183 = vpop.permute.xlu0 %1182
  %1185 = vrot.lane.b32.xlu0 %v1181, 16
  %v1186 = vpop.permute.xlu0 %1185
  %1188 = vrot.lane.b32.xlu0 %v1181, 24
  %v1189 = vpop.permute.xlu0 %1188
  %1191 = vrot.lane.b32.xlu0 %v1181, 32
  %v1192 = vpop.permute.xlu0 %1191
  %1194 = vrot.lane.b32.xlu0 %v1181, 40
  %v1195 = vpop.permute.xlu0 %1194
  %1197 = vrot.lane.b32.xlu0 %v1181, 48
  %v1198 = vpop.permute.xlu0 %1197
  %1200 = vrot.lane.b32.xlu0 %v1181, 56
  %v1201 = vpop.permute.xlu0 %1200
  %1203 = vrot.lane.b32.xlu0 %v1181, 64
  %v1204 = vpop.permute.xlu0 %1203
  %1206 = vrot.lane.b32.xlu0 %v1181, 72
  %v1207 = vpop.permute.xlu0 %1206
  %1209 = vrot.lane.b32.xlu0 %v1181, 80
  %v1210 = vpop.permute.xlu0 %1209
  %1212 = vrot.lane.b32.xlu0 %v1181, 88
  %v1213 = vpop.permute.xlu0 %1212
  %1215 = vrot.lane.b32.xlu0 %v1181, 96
  %v1216 = vpop.permute.xlu0 %1215
  %1218 = vrot.lane.b32.xlu0 %v1181, 104
  %v1219 = vpop.permute.xlu0 %1218
  %1221 = vrot.lane.b32.xlu0 %v1181, 112
  %v1222 = vpop.permute.xlu0 %1221
  %1224 = vrot.lane.b32.xlu0 %v1181, 120
  %v1225 = vpop.permute.xlu0 %1224
  %v1227 = vsel %vm371, %v1173, %v1183
  %v1228 = vsel %vm373, %v1227, %v1186
  %v1229 = vsel %vm375, %v1228, %v1189
  %v1230 = vsel %vm377, %v1229, %v1192
  %v1231 = vsel %vm379, %v1230, %v1195
  %v1232 = vsel %vm381, %v1231, %v1198
  %v1233 = vsel %vm383, %v1232, %v1201
  %v1234 = vsel %vm75, %v1233, %v1204
  %v1235 = vsel %vm386, %v1234, %v1207
  %v1236 = vsel %vm388, %v1235, %v1210
  %v1237 = vsel %vm390, %v1236, %v1213
  %v1238 = vsel %vm392, %v1237, %v1216
  %v1239 = vsel %vm394, %v1238, %v1219
  %v1240 = vsel %vm263, %v1239, %v1222
  %v1241 = vsel %vm1097, %v1240, %v1225
  %v1243 = vlaneseq
  %v1244 = vshrl.u32 %v1243, 7
  %v1245 = vsub.s32 0, %v1244
  %v1246 = vrot.slane %v1176, %v1245
  %1247 = vrot.lane.b32.xlu0 %v1246, 8
  %v1248 = vpop.permute.xlu0 %1247
  %1250 = vrot.lane.b32.xlu0 %v1246, 16
  %v1251 = vpop.permute.xlu0 %1250
  %1253 = vrot.lane.b32.xlu0 %v1246, 24
  %v1254 = vpop.permute.xlu0 %1253
  %1256 = vrot.lane.b32.xlu0 %v1246, 32
  %v1257 = vpop.permute.xlu0 %1256
  %1259 = vrot.lane.b32.xlu0 %v1246, 40
  %v1260 = vpop.permute.xlu0 %1259
  %1262 = vrot.lane.b32.xlu0 %v1246, 48
  %v1263 = vpop.permute.xlu0 %1262
  %1265 = vrot.lane.b32.xlu0 %v1246, 56
  %v1266 = vpop.permute.xlu0 %1265
  %1268 = vrot.lane.b32.xlu0 %v1246, 64
  %v1269 = vpop.permute.xlu0 %1268
  %1271 = vrot.lane.b32.xlu0 %v1246, 72
  %v1272 = vpop.permute.xlu0 %1271
  %1274 = vrot.lane.b32.xlu0 %v1246, 80
  %v1275 = vpop.permute.xlu0 %1274
  %1277 = vrot.lane.b32.xlu0 %v1246, 88
  %v1278 = vpop.permute.xlu0 %1277
  %1280 = vrot.lane.b32.xlu0 %v1246, 96
  %v1281 = vpop.permute.xlu0 %1280
  %1283 = vrot.lane.b32.xlu0 %v1246, 104
  %v1284 = vpop.permute.xlu0 %1283
  %1286 = vrot.lane.b32.xlu0 %v1246, 112
  %v1287 = vpop.permute.xlu0 %1286
  %1289 = vrot.lane.b32.xlu0 %v1246, 120
  %v1290 = vpop.permute.xlu0 %1289
  %v1292 = vsel %vm371, %v1176, %v1248
  %v1293 = vsel %vm373, %v1292, %v1251
  %v1294 = vsel %vm375, %v1293, %v1254
  %v1295 = vsel %vm377, %v1294, %v1257
  %v1296 = vsel %vm379, %v1295, %v1260
  %v1297 = vsel %vm381, %v1296, %v1263
  %v1298 = vsel %vm383, %v1297, %v1266
  %v1299 = vsel %vm75, %v1298, %v1269
  %v1300 = vsel %vm386, %v1299, %v1272
  %v1301 = vsel %vm388, %v1300, %v1275
  %v1302 = vsel %vm390, %v1301, %v1278
  %v1303 = vsel %vm392, %v1302, %v1281
  %v1304 = vsel %vm394, %v1303, %v1284
  %v1305 = vsel %vm263, %v1304, %v1287
  %v1306 = vsel %vm1097, %v1305, %v1290
  %v1307 = vlaneseq
  %v1308 = vshrl.u32 %v1307, 7
  %v1309 = vsub.s32 0, %v1308
  %v1310 = vrot.slane %v1241, %v1309
  %v1311 = vmul.f32 %v940, %v1310
  %v1312 = vmul.f32 %v943, %v1310
  %v1313 = vmul.f32 %v948, %v1310
  %v1314 = vmul.f32 %v951, %v1310
  %v1315 = vlaneseq
  %v1316 = vshrl.u32 %v1315, 7
  %v1317 = vsub.s32 0, %v1316
  %v1318 = vrot.slane %v1306, %v1317
  %v1319 = vadd.f32 %v1311, %v1318
  %v1320 = vadd.f32 %v1312, %v1318
  %v1321 = vadd.f32 %v1313, %v1318
  %v1322 = vadd.f32 %v1314, %v1318
  %v1323 = vmax.f32 %v1319, 0.0
  %v1324 = vmax.f32 %v1320, 0.0
  %v1325 = vmax.f32 %v1321, 0.0
  %v1326 = vmax.f32 %v1322, 0.0
  %1327 = vst [vmem:[%s9] sm:$0xff] %v1323
  %1328 = vst [vmem:[%s9 + $0x8] sm:$0xff] %v1324
  %1329 = vst [vmem:[%s9 + $0x10] sm:$0xff] %v1325
  %1330 = vst [vmem:[%s9 + $0x18] sm:$0xff] %v1326
  %v1331 = vrot.slane %v1323, 1
  %v1332 = vrot.slane %v1324, 1
  %v1333 = vrot.slane %v1325, 1
  %v1334 = vrot.slane %v1326, 1
  %v1335 = vsel %vm45, %v1333, %v1334
  %v1336 = vsel %vm45, %v1332, %v1333
  %v1337 = vsel %vm45, %v1331, %v1332
  %v1338 = vsel %vm45, %v1334, %v1331
  %v1339 = vadd.f32 %v1323, %v1337
  %v1340 = vadd.f32 %v1324, %v1336
  %v1341 = vadd.f32 %v1325, %v1335
  %v1342 = vadd.f32 %v1326, %v1338
  %1347 = vrot.lane.b32.xlu0 %v1339, 120
  %v1348 = vpop.permute.xlu0 %1347
  %1349 = vrot.lane.b32.xlu0 %v1340, 120
  %v1350 = vpop.permute.xlu0 %1349
  %1351 = vrot.lane.b32.xlu0 %v1341, 120
  %v1352 = vpop.permute.xlu0 %1351
  %1353 = vrot.lane.b32.xlu0 %v1342, 120
  %v1354 = vpop.permute.xlu0 %1353
  %v1359 = vadd.f32 %v1339, %v1348
  %v1360 = vadd.f32 %v1340, %v1350
  %v1361 = vadd.f32 %v1341, %v1352
  %v1362 = vadd.f32 %v1342, %v1354
  %v1363 = vmul.f32 %v1359, 0.25
  %v1364 = vmul.f32 %v1360, 0.25
  %v1365 = vmul.f32 %v1361, 0.25
  %v1366 = vmul.f32 %v1362, 0.25
  %1371 = vrot.lane.b32.xlu0 %v1363, 120
  %v1372 = vpop.permute.xlu0 %1371
  %1373 = vrot.lane.b32.xlu0 %v1364, 120
  %v1374 = vpop.permute.xlu0 %1373
  %1375 = vrot.lane.b32.xlu0 %v1365, 120
  %v1376 = vpop.permute.xlu0 %1375
  %1377 = vrot.lane.b32.xlu0 %v1366, 120
  %v1378 = vpop.permute.xlu0 %1377
  %1383 = vrot.lane.b32.xlu0 %v1363, 112
  %v1384 = vpop.permute.xlu0 %1383
  %1385 = vrot.lane.b32.xlu0 %v1364, 112
  %v1386 = vpop.permute.xlu0 %1385
  %1387 = vrot.lane.b32.xlu0 %v1365, 112
  %v1388 = vpop.permute.xlu0 %1387
  %1389 = vrot.lane.b32.xlu0 %v1366, 112
  %v1390 = vpop.permute.xlu0 %1389
  %1395 = vrot.lane.b32.xlu0 %v1363, 104
  %v1396 = vpop.permute.xlu0 %1395
  %1397 = vrot.lane.b32.xlu0 %v1364, 104
  %v1398 = vpop.permute.xlu0 %1397
  %1399 = vrot.lane.b32.xlu0 %v1365, 104
  %v1400 = vpop.permute.xlu0 %1399
  %1401 = vrot.lane.b32.xlu0 %v1366, 104
  %v1402 = vpop.permute.xlu0 %1401
  %1407 = vrot.lane.b32.xlu0 %v1363, 96
  %v1408 = vpop.permute.xlu0 %1407
  %1409 = vrot.lane.b32.xlu0 %v1364, 96
  %v1410 = vpop.permute.xlu0 %1409
  %1411 = vrot.lane.b32.xlu0 %v1365, 96
  %v1412 = vpop.permute.xlu0 %1411
  %1413 = vrot.lane.b32.xlu0 %v1366, 96
  %v1414 = vpop.permute.xlu0 %1413
  %1419 = vrot.lane.b32.xlu0 %v1363, 88
  %v1420 = vpop.permute.xlu0 %1419
  %1421 = vrot.lane.b32.xlu0 %v1364, 88
  %v1422 = vpop.permute.xlu0 %1421
  %1423 = vrot.lane.b32.xlu0 %v1365, 88
  %v1424 = vpop.permute.xlu0 %1423
  %1425 = vrot.lane.b32.xlu0 %v1366, 88
  %v1426 = vpop.permute.xlu0 %1425
  %v1431 = vsel %vm371, %v1363, %v1372
  %v1432 = vsel %vm371, %v1364, %v1374
  %v1433 = vsel %vm371, %v1365, %v1376
  %v1434 = vsel %vm371, %v1366, %v1378
  %v1435 = vsel %vm373, %v1431, %v1384
  %v1436 = vsel %vm373, %v1432, %v1386
  %v1437 = vsel %vm373, %v1433, %v1388
  %v1438 = vsel %vm373, %v1434, %v1390
  %v1439 = vsel %vm375, %v1435, %v1396
  %v1440 = vsel %vm375, %v1436, %v1398
  %v1441 = vsel %vm375, %v1437, %v1400
  %v1442 = vsel %vm375, %v1438, %v1402
  %v1443 = vsel %vm377, %v1439, %v1408
  %v1444 = vsel %vm377, %v1440, %v1410
  %v1445 = vsel %vm377, %v1441, %v1412
  %v1446 = vsel %vm377, %v1442, %v1414
  %v1447 = vsel %vm379, %v1443, %v1420
  %v1448 = vsel %vm379, %v1444, %v1422
  %v1449 = vsel %vm379, %v1445, %v1424
  %v1450 = vsel %vm379, %v1446, %v1426
  %v1451 = vsel %vm381, %v1447, 0.0
  %v1452 = vsel %vm381, %v1448, 0.0
  %v1453 = vsel %vm381, %v1449, 0.0
  %v1454 = vsel %vm381, %v1450, 0.0
  %1455 = vst [vmem:[%s10] sm:$0xff] %v1451
  %1456 = vst [vmem:[%s10 + $0x8] sm:$0xff] %v1452
  %1457 = vst [vmem:[%s10 + $0x10] sm:$0xff] %v1453
  %1458 = vst [vmem:[%s10 + $0x18] sm:$0xff] %v1454
  // Predicated region
  $region38: #{conv_down_forward.1} parent=0 // pred_check
    _
  $region39: #{conv_down_forward.1} parent=0 // pred_check_branch
    %1460 = sbr.rel (0) target = $region41
  $region40: #{conv_down_forward.1} parent=0 // pred_region
    _
  $region41: #{conv_down_forward.1} parent=0 // pred_fallthru
    _
  // Predicated region
  $region42: #{conv_down_forward.1} parent=0 // pred_check
    _
  $region43: #{conv_down_forward.1} parent=0 // pred_check_branch
    %1462 = sbr.rel (0) target = $region45
  $region44: #{conv_down_forward.1} parent=0 // pred_region
    _
  $region45: #{conv_down_forward.1} parent=0 // pred_fallthru
    _
  // Predicated region
  $region46: #{conv_down_forward.1} parent=0 // pred_check
    _
  $region47: #{conv_down_forward.1} parent=0 // pred_check_branch
    %1464 = sbr.rel (0) target = $region49
  $region48: #{conv_down_forward.1} parent=0 // pred_region
    _
  $region49: #{conv_down_forward.1} parent=0 // pred_fallthru
    _
  // Predicated region
  $region50: #{conv_down_forward.1} parent=0 // pred_check
    _
  $region51: #{conv_down_forward.1} parent=0 // pred_check_branch
    %1466 = sbr.rel (0) target = $region53
  $region52: #{conv_down_forward.1} parent=0 // pred_region
    _
  $region53: #{conv_down_forward.1} parent=0 // pred_fallthru
    _

</llo_original>
